<compile_context>
chip_gen: v7x
topology: tpu7x:2x2x1
jax: 0.10.0
libtpu: 0.0.40
codegen_flags: <defaults>
</compile_context>

<pallas_src>
import functools

import jax
import jax.numpy as jnp
import numpy as np
from jax.experimental import pallas as pl
from jax.experimental.pallas import tpu as pltpu

EPS = 1e-5
LANES = 128


def _round_up(v, m):
    return (v + m - 1) // m * m


# ----------------------------- Pallas kernel -------------------------------- #

def _conv3x3_kernel(*refs, taps, spatial, relu, has_residual):
    """Fused 3x3 conv (BN folded) [+ residual] [+ relu] for one batch element.

    refs (positional, per grid step):
      x_ref : (1, s*s*Hg, Wg, Cg)  bf16  padded, stride-collapsed input
      w_ref : (9, Cg, Lp)          bf16  folded conv*BN weights (one per tap)
      b_ref : (1, Lp)              f32   folded BN shift
      r_ref : (1, Ho*Wo, Lp)       f32   residual (only if has_residual)
      o_ref : (1, Ho*Wo, Lp)       f32
    """
    if has_residual:
        x_ref, w_ref, b_ref, r_ref, o_ref = refs
    else:
        x_ref, w_ref, b_ref, o_ref = refs
        r_ref = None
    ho, wo = spatial
    m = ho * wo
    lp = o_ref.shape[-1]

    # Widen once so the static tap slices / (Ho,Wo,C)->(M,C) merges happen on
    # a native (8,128)-tiled f32 value; the MXU operands go back to bf16.
    x = x_ref[0].astype(jnp.float32)                  # (s*s*Hg, Wg, Cg)
    acc = jnp.zeros((m, lp), jnp.float32)
    for t, (r0, c0) in enumerate(taps):               # 9 shifted MXU matmuls
        xt = x[r0:r0 + ho, c0:c0 + wo, :]             # (Ho, Wo, Cg) static slice
        xt = xt.reshape(m, xt.shape[-1]).astype(jnp.bfloat16)
        acc = acc + jnp.dot(xt, w_ref[t], preferred_element_type=jnp.float32)

    acc = acc + b_ref[...]
    if r_ref is not None:
        acc = acc + r_ref[0]
    if relu:
        acc = jnp.maximum(acc, 0.0)
    o_ref[0] = acc.astype(o_ref.dtype)


# ------------------------------ JAX glue ------------------------------------ #

def _fold_conv_bn(p):
    """Fold conv bias + eval-mode BatchNorm into per-channel weight/shift."""
    scale = p["gamma"] / jnp.sqrt(p["var"] + EPS)                 # (Cout,)
    shift = p["beta"] + scale * (p["b"] - p["mean"])              # (Cout,)
    wf = jnp.transpose(p["w"], (2, 3, 1, 0)) * scale              # (3,3,Cin,Cout)
    return wf, shift


def _space_to_parity(x_nchw, stride):
    """NCHW -> (N, s*s*Hg, Wg, C): zero-pad by 1, split H/W by stride parity.

    One XLA transpose, no data expansion. Afterwards a stride-s 3x3 conv is a
    stride-1 conv whose 9 taps are contiguous slices of this array.
    """
    n, c, h, w = x_nchw.shape
    s = stride
    hg, wg = -(-(h + 2) // s), -(-(w + 2) // s)
    xp = jnp.pad(x_nchw, ((0, 0), (0, 0),
                          (1, hg * s - h - 1), (1, wg * s - w - 1)))
    xp = xp.reshape(n, c, hg, s, wg, s)
    xp = xp.transpose(0, 3, 5, 2, 4, 1)                # (N, si, sj, Hg, Wg, C)
    return xp.reshape(n, s * s * hg, wg, c)


def _conv3x3_block(x_par, w_taps, bias, spatial, stride, *, relu,
                   residual=None, out_dtype=jnp.float32):
    """Run the fused conv kernel over a (N,) grid. Returns (N, Ho*Wo, Lp)."""
    n, rows, wg, cg = x_par.shape
    ho, wo = spatial
    lp = w_taps.shape[-1]
    s = stride
    hg = rows // (s * s)
    # static (row, col) offset of each of the 9 taps in the parity layout
    taps = tuple(((((kh % s) * s + (kw % s)) * hg + kh // s), kw // s)
                 for kh in range(3) for kw in range(3))

    kernel = functools.partial(_conv3x3_kernel, taps=taps, spatial=(ho, wo),
                               relu=relu, has_residual=residual is not None)

    in_specs = [
        pl.BlockSpec((1, rows, wg, cg), lambda i: (i, 0, 0, 0)),
        pl.BlockSpec((9, cg, lp), lambda i: (0, 0, 0)),   # weights stay resident
        pl.BlockSpec((1, lp), lambda i: (0, 0)),
    ]
    args = [x_par, w_taps, bias]
    if residual is not None:
        in_specs.append(pl.BlockSpec((1, ho * wo, lp), lambda i: (i, 0, 0)))
        args.append(residual)

    return pl.pallas_call(
        kernel,
        out_shape=jax.ShapeDtypeStruct((n, ho * wo, lp), out_dtype),
        grid=(n,),
        in_specs=in_specs,
        out_specs=pl.BlockSpec((1, ho * wo, lp), lambda i: (i, 0, 0)),
        compiler_params=pltpu.CompilerParams(
            dimension_semantics=("parallel",),
            vmem_limit_bytes=32 * 1024 * 1024),
    )(*args)


@functools.partial(jax.jit, static_argnames=("stride",))
def res_down_block(x, p_cbr, p_cb, p_down, *, stride):
    """x: (N, Cin, H, W) f32 NCHW -> (N, Cout, Ho, Wo) f32 NCHW."""
    n, cin, h, w = x.shape
    cout = p_cbr["w"].shape[0]
    s = stride
    ho, wo = (h - 1) // s + 1, (w - 1) // s + 1        # 3x3 conv, pad=1
    if wo % 8:
        # TODO(synk): Wo not a multiple of 8 would need sublane padding before
        # the in-kernel (Ho,Wo,C)->(Ho*Wo,C) merge.
        raise NotImplementedError("Wo must be a multiple of 8")

    # ---- kernel 1: fused downsample (CBR) + cbr (CBR), both stride-s ------- #
    wf_d, sh_d = _fold_conv_bn(p_down)
    wf_c, sh_c = _fold_conv_bn(p_cbr)
    lp1 = _round_up(2 * cout, LANES)
    w1 = jnp.zeros((3, 3, cin, lp1), jnp.float32)
    w1 = w1.at[..., :cout].set(wf_d).at[..., cout:2 * cout].set(wf_c)
    b1 = jnp.zeros((1, lp1), jnp.float32)
    b1 = b1.at[0, :cout].set(sh_d).at[0, cout:2 * cout].set(sh_c)
    w1_taps = w1.reshape(9, cin, lp1).astype(jnp.bfloat16)

    x_par = _space_to_parity(x, s).astype(jnp.bfloat16)
    fused = _conv3x3_block(x_par, w1_taps, b1, (ho, wo), s, relu=True)
    # fused lanes: [0:cout] = residual (downsample), [cout:2*cout] = cbr out.

    # ---- kernel 2: cb (CB) stride-1 conv + residual add + final relu ------- #
    wf_b, sh_b = _fold_conv_bn(p_cb)
    lp2 = _round_up(cout, LANES)
    w2 = jnp.zeros((3, 3, lp1, lp2), jnp.float32)
    w2 = w2.at[:, :, cout:2 * cout, :cout].set(wf_b)   # reads only cbr lanes
    b2 = jnp.zeros((1, lp2), jnp.float32).at[0, :cout].set(sh_b)
    w2_taps = w2.reshape(9, lp1, lp2).astype(jnp.bfloat16)

    # stays NHWC-flat; reshape + zero-pad the conv halo (no transpose)
    y = fused.reshape(n, ho, wo, lp1)
    y = jnp.pad(y, ((0, 0), (1, 1), (1, 1), (0, 0))).astype(jnp.bfloat16)

    # residual lanes >= cout only touch output lanes that are sliced off below.
    out = _conv3x3_block(y, w2_taps, b2, (ho, wo), 1, relu=True,
                         residual=fused[:, :, :lp2])

    out = out[:, :, :cout].reshape(n, ho, wo, cout)
    return out.transpose(0, 3, 1, 2)                   # single NHWC->NCHW at end


# --------------------------- pure-JAX reference ----------------------------- #

def _ref_conv_bn(x, p, stride, relu):
    y = jax.lax.conv_general_dilated(
        x, p["w"], (stride, stride), ((1, 1), (1, 1)),
        dimension_numbers=("NCHW", "OIHW", "NCHW"))
    y = y + p["b"][None, :, None, None]
    inv = 1.0 / jnp.sqrt(p["var"] + EPS)
    y = ((y - p["mean"][None, :, None, None])
         * (p["gamma"] * inv)[None, :, None, None]
         + p["beta"][None, :, None, None])
    return jnp.maximum(y, 0.0) if relu else y


def _ref_block(x, p_cbr, p_cb, p_down, stride):
    residual = _ref_conv_bn(x, p_down, stride, True)
    out = _ref_conv_bn(x, p_cbr, stride, True)
    out = _ref_conv_bn(out, p_cb, 1, False)
    return jnp.maximum(out + residual, 0.0)


# --------------------------------- main ------------------------------------ #

def _make_params(key, cin, cout):
    ks = jax.random.split(key, 6)
    return {
        "w": 0.1 * jax.random.normal(ks[0], (cout, cin, 3, 3), jnp.float32),
        "b": 0.1 * jax.random.normal(ks[1], (cout,), jnp.float32),   # Conv2d bias
        "gamma": 0.5 + jax.random.uniform(ks[2], (cout,), jnp.float32),
        "beta": 0.1 * jax.random.normal(ks[3], (cout,), jnp.float32),
        "mean": 0.1 * jax.random.normal(ks[4], (cout,), jnp.float32),
        "var": 0.5 + jax.random.uniform(ks[5], (cout,), jnp.float32),
    }


if __name__ == "__main__":
    in_channels, out_channels, stride = 4, 8, 2
    N, H, W = 2, 16, 16

    root = jax.random.PRNGKey(0)
    kx, k_cbr, k_cb, k_down = jax.random.split(root, 4)

    x = jax.random.normal(kx, (N, in_channels, H, W), jnp.float32)
    p_cbr = _make_params(k_cbr, in_channels, out_channels)
    p_cb = _make_params(k_cb, out_channels, out_channels)
    p_down = _make_params(k_down, in_channels, out_channels)

    out = res_down_block(x, p_cbr, p_cb, p_down, stride=stride)
    out = jax.block_until_ready(out)

    ref = _ref_block(x, p_cbr, p_cb, p_down, stride)
    assert out.shape == (N, out_channels, H // stride, W // stride), out.shape
    # bf16 conv operands (f32 accumulation) -> loosened tolerance vs f32 ref.
    assert np.allclose(np.asarray(out), np.asarray(ref), atol=5e-2, rtol=5e-2), \
        "mismatch vs reference"

    print("KERNEL_OK")
</pallas_src>

<mosaic_0001>
module attributes {stable_mosaic.version = 11 : i64} {
  func.func @_conv3x3_kernel(%arg0: i32, %arg1: memref<1x36x9x4xbf16, #tpu.memory_space<vmem>>, %arg2: memref<9x4x128xbf16, #tpu.memory_space<vmem>>, %arg3: memref<1x128xf32, #tpu.memory_space<vmem>>, %arg4: memref<1x64x128xf32, #tpu.memory_space<vmem>>) attributes {dimension_semantics = [#tpu.dimension_semantics<parallel>], iteration_bounds = array<i64: 2>, scalar_prefetch = 0 : i64, scratch_operands = 0 : i64, tpu.core_type = #tpu.core_type<tc>, window_params = [{transform_indices = @transform_0, window_bounds = array<i64: 1, 36, 9, 4>}, {pipeline_mode = #tpu.pipeline_mode<synchronous>, transform_indices = @transform_1, window_bounds = array<i64: 9, 4, 128>}, {pipeline_mode = #tpu.pipeline_mode<synchronous>, transform_indices = @transform_2, window_bounds = array<i64: 1, 128>}, {transform_indices = @transform_3, window_bounds = array<i64: 1, 64, 128>}]} {
    %c0 = arith.constant 0 : index
    %c0_0 = arith.constant 0 : index
    %c0_1 = arith.constant 0 : index
    %c0_2 = arith.constant 0 : index
    %0 = vector.load %arg1[%c0, %c0_0, %c0_1, %c0_2] : memref<1x36x9x4xbf16, #tpu.memory_space<vmem>>, vector<1x36x9x4xbf16>
    %1 = vector.shape_cast %0 : vector<1x36x9x4xbf16> to vector<36x9x4xbf16>
    %2 = arith.extf %1 : vector<36x9x4xbf16> to vector<36x9x4xf32>
    %cst = arith.constant 0.000000e+00 : f32
    %3 = vector.broadcast %cst : f32 to vector<64x128xf32>
    %4 = vector.extract_strided_slice %2 {offsets = [0, 0, 0], sizes = [8, 8, 4], strides = [1, 1, 1]} : vector<36x9x4xf32> to vector<8x8x4xf32>
    %5 = vector.shape_cast %4 : vector<8x8x4xf32> to vector<64x4xf32>
    %6 = arith.truncf %5 : vector<64x4xf32> to vector<64x4xbf16>
    %c0_3 = arith.constant 0 : index
    %c0_4 = arith.constant 0 : index
    %c0_5 = arith.constant 0 : index
    %7 = vector.load %arg2[%c0_3, %c0_4, %c0_5] : memref<9x4x128xbf16, #tpu.memory_space<vmem>>, vector<1x4x128xbf16>
    %8 = vector.shape_cast %7 : vector<1x4x128xbf16> to vector<4x128xbf16>
    %cst_6 = arith.constant dense<0.000000e+00> : vector<64x128xf32>
    %9 = tpu.matmul %6, %8, %cst_6 {dimension_numbers = #tpu.dot_dimension_numbers<[1], [0], [0], [1], [0, 0, 1, 1], [], []>} : vector<64x4xbf16>, vector<4x128xbf16>, vector<64x128xf32> -> vector<64x128xf32>
    %10 = arith.addf %3, %9 : vector<64x128xf32>
    %11 = vector.extract_strided_slice %2 {offsets = [9, 0, 0], sizes = [8, 8, 4], strides = [1, 1, 1]} : vector<36x9x4xf32> to vector<8x8x4xf32>
    %12 = vector.shape_cast %11 : vector<8x8x4xf32> to vector<64x4xf32>
    %13 = arith.truncf %12 : vector<64x4xf32> to vector<64x4xbf16>
    %c1 = arith.constant 1 : index
    %c0_7 = arith.constant 0 : index
    %c0_8 = arith.constant 0 : index
    %14 = vector.load %arg2[%c1, %c0_7, %c0_8] : memref<9x4x128xbf16, #tpu.memory_space<vmem>>, vector<1x4x128xbf16>
    %15 = vector.shape_cast %14 : vector<1x4x128xbf16> to vector<4x128xbf16>
    %cst_9 = arith.constant dense<0.000000e+00> : vector<64x128xf32>
    %16 = tpu.matmul %13, %15, %cst_9 {dimension_numbers = #tpu.dot_dimension_numbers<[1], [0], [0], [1], [0, 0, 1, 1], [], []>} : vector<64x4xbf16>, vector<4x128xbf16>, vector<64x128xf32> -> vector<64x128xf32>
    %17 = arith.addf %10, %16 : vector<64x128xf32>
    %18 = vector.extract_strided_slice %2 {offsets = [0, 1, 0], sizes = [8, 8, 4], strides = [1, 1, 1]} : vector<36x9x4xf32> to vector<8x8x4xf32>
    %19 = vector.shape_cast %18 : vector<8x8x4xf32> to vector<64x4xf32>
    %20 = arith.truncf %19 : vector<64x4xf32> to vector<64x4xbf16>
    %c2 = arith.constant 2 : index
    %c0_10 = arith.constant 0 : index
    %c0_11 = arith.constant 0 : index
    %21 = vector.load %arg2[%c2, %c0_10, %c0_11] : memref<9x4x128xbf16, #tpu.memory_space<vmem>>, vector<1x4x128xbf16>
    %22 = vector.shape_cast %21 : vector<1x4x128xbf16> to vector<4x128xbf16>
    %cst_12 = arith.constant dense<0.000000e+00> : vector<64x128xf32>
    %23 = tpu.matmul %20, %22, %cst_12 {dimension_numbers = #tpu.dot_dimension_numbers<[1], [0], [0], [1], [0, 0, 1, 1], [], []>} : vector<64x4xbf16>, vector<4x128xbf16>, vector<64x128xf32> -> vector<64x128xf32>
    %24 = arith.addf %17, %23 : vector<64x128xf32>
    %25 = vector.extract_strided_slice %2 {offsets = [18, 0, 0], sizes = [8, 8, 4], strides = [1, 1, 1]} : vector<36x9x4xf32> to vector<8x8x4xf32>
    %26 = vector.shape_cast %25 : vector<8x8x4xf32> to vector<64x4xf32>
    %27 = arith.truncf %26 : vector<64x4xf32> to vector<64x4xbf16>
    %c3 = arith.constant 3 : index
    %c0_13 = arith.constant 0 : index
    %c0_14 = arith.constant 0 : index
    %28 = vector.load %arg2[%c3, %c0_13, %c0_14] : memref<9x4x128xbf16, #tpu.memory_space<vmem>>, vector<1x4x128xbf16>
    %29 = vector.shape_cast %28 : vector<1x4x128xbf16> to vector<4x128xbf16>
    %cst_15 = arith.constant dense<0.000000e+00> : vector<64x128xf32>
    %30 = tpu.matmul %27, %29, %cst_15 {dimension_numbers = #tpu.dot_dimension_numbers<[1], [0], [0], [1], [0, 0, 1, 1], [], []>} : vector<64x4xbf16>, vector<4x128xbf16>, vector<64x128xf32> -> vector<64x128xf32>
    %31 = arith.addf %24, %30 : vector<64x128xf32>
    %32 = vector.extract_strided_slice %2 {offsets = [27, 0, 0], sizes = [8, 8, 4], strides = [1, 1, 1]} : vector<36x9x4xf32> to vector<8x8x4xf32>
    %33 = vector.shape_cast %32 : vector<8x8x4xf32> to vector<64x4xf32>
    %34 = arith.truncf %33 : vector<64x4xf32> to vector<64x4xbf16>
    %c4 = arith.constant 4 : index
    %c0_16 = arith.constant 0 : index
    %c0_17 = arith.constant 0 : index
    %35 = vector.load %arg2[%c4, %c0_16, %c0_17] : memref<9x4x128xbf16, #tpu.memory_space<vmem>>, vector<1x4x128xbf16>
    %36 = vector.shape_cast %35 : vector<1x4x128xbf16> to vector<4x128xbf16>
    %cst_18 = arith.constant dense<0.000000e+00> : vector<64x128xf32>
    %37 = tpu.matmul %34, %36, %cst_18 {dimension_numbers = #tpu.dot_dimension_numbers<[1], [0], [0], [1], [0, 0, 1, 1], [], []>} : vector<64x4xbf16>, vector<4x128xbf16>, vector<64x128xf32> -> vector<64x128xf32>
    %38 = arith.addf %31, %37 : vector<64x128xf32>
    %39 = vector.extract_strided_slice %2 {offsets = [18, 1, 0], sizes = [8, 8, 4], strides = [1, 1, 1]} : vector<36x9x4xf32> to vector<8x8x4xf32>
    %40 = vector.shape_cast %39 : vector<8x8x4xf32> to vector<64x4xf32>
    %41 = arith.truncf %40 : vector<64x4xf32> to vector<64x4xbf16>
    %c5 = arith.constant 5 : index
    %c0_19 = arith.constant 0 : index
    %c0_20 = arith.constant 0 : index
    %42 = vector.load %arg2[%c5, %c0_19, %c0_20] : memref<9x4x128xbf16, #tpu.memory_space<vmem>>, vector<1x4x128xbf16>
    %43 = vector.shape_cast %42 : vector<1x4x128xbf16> to vector<4x128xbf16>
    %cst_21 = arith.constant dense<0.000000e+00> : vector<64x128xf32>
    %44 = tpu.matmul %41, %43, %cst_21 {dimension_numbers = #tpu.dot_dimension_numbers<[1], [0], [0], [1], [0, 0, 1, 1], [], []>} : vector<64x4xbf16>, vector<4x128xbf16>, vector<64x128xf32> -> vector<64x128xf32>
    %45 = arith.addf %38, %44 : vector<64x128xf32>
    %46 = vector.extract_strided_slice %2 {offsets = [1, 0, 0], sizes = [8, 8, 4], strides = [1, 1, 1]} : vector<36x9x4xf32> to vector<8x8x4xf32>
    %47 = vector.shape_cast %46 : vector<8x8x4xf32> to vector<64x4xf32>
    %48 = arith.truncf %47 : vector<64x4xf32> to vector<64x4xbf16>
    %c6 = arith.constant 6 : index
    %c0_22 = arith.constant 0 : index
    %c0_23 = arith.constant 0 : index
    %49 = vector.load %arg2[%c6, %c0_22, %c0_23] : memref<9x4x128xbf16, #tpu.memory_space<vmem>>, vector<1x4x128xbf16>
    %50 = vector.shape_cast %49 : vector<1x4x128xbf16> to vector<4x128xbf16>
    %cst_24 = arith.constant dense<0.000000e+00> : vector<64x128xf32>
    %51 = tpu.matmul %48, %50, %cst_24 {dimension_numbers = #tpu.dot_dimension_numbers<[1], [0], [0], [1], [0, 0, 1, 1], [], []>} : vector<64x4xbf16>, vector<4x128xbf16>, vector<64x128xf32> -> vector<64x128xf32>
    %52 = arith.addf %45, %51 : vector<64x128xf32>
    %53 = vector.extract_strided_slice %2 {offsets = [10, 0, 0], sizes = [8, 8, 4], strides = [1, 1, 1]} : vector<36x9x4xf32> to vector<8x8x4xf32>
    %54 = vector.shape_cast %53 : vector<8x8x4xf32> to vector<64x4xf32>
    %55 = arith.truncf %54 : vector<64x4xf32> to vector<64x4xbf16>
    %c7 = arith.constant 7 : index
    %c0_25 = arith.constant 0 : index
    %c0_26 = arith.constant 0 : index
    %56 = vector.load %arg2[%c7, %c0_25, %c0_26] : memref<9x4x128xbf16, #tpu.memory_space<vmem>>, vector<1x4x128xbf16>
    %57 = vector.shape_cast %56 : vector<1x4x128xbf16> to vector<4x128xbf16>
    %cst_27 = arith.constant dense<0.000000e+00> : vector<64x128xf32>
    %58 = tpu.matmul %55, %57, %cst_27 {dimension_numbers = #tpu.dot_dimension_numbers<[1], [0], [0], [1], [0, 0, 1, 1], [], []>} : vector<64x4xbf16>, vector<4x128xbf16>, vector<64x128xf32> -> vector<64x128xf32>
    %59 = arith.addf %52, %58 : vector<64x128xf32>
    %60 = vector.extract_strided_slice %2 {offsets = [1, 1, 0], sizes = [8, 8, 4], strides = [1, 1, 1]} : vector<36x9x4xf32> to vector<8x8x4xf32>
    %61 = vector.shape_cast %60 : vector<8x8x4xf32> to vector<64x4xf32>
    %62 = arith.truncf %61 : vector<64x4xf32> to vector<64x4xbf16>
    %c8 = arith.constant 8 : index
    %c0_28 = arith.constant 0 : index
    %c0_29 = arith.constant 0 : index
    %63 = vector.load %arg2[%c8, %c0_28, %c0_29] : memref<9x4x128xbf16, #tpu.memory_space<vmem>>, vector<1x4x128xbf16>
    %64 = vector.shape_cast %63 : vector<1x4x128xbf16> to vector<4x128xbf16>
    %cst_30 = arith.constant dense<0.000000e+00> : vector<64x128xf32>
    %65 = tpu.matmul %62, %64, %cst_30 {dimension_numbers = #tpu.dot_dimension_numbers<[1], [0], [0], [1], [0, 0, 1, 1], [], []>} : vector<64x4xbf16>, vector<4x128xbf16>, vector<64x128xf32> -> vector<64x128xf32>
    %66 = arith.addf %59, %65 : vector<64x128xf32>
    %c0_31 = arith.constant 0 : index
    %c0_32 = arith.constant 0 : index
    %67 = vector.load %arg3[%c0_31, %c0_32] : memref<1x128xf32, #tpu.memory_space<vmem>>, vector<1x128xf32>
    %68 = vector.broadcast %67 : vector<1x128xf32> to vector<64x128xf32>
    %69 = arith.addf %66, %68 : vector<64x128xf32>
    %cst_33 = arith.constant 0.000000e+00 : f32
    %70 = vector.broadcast %cst_33 : f32 to vector<64x128xf32>
    %71 = arith.maximumf %69, %70 : vector<64x128xf32>
    %c0_34 = arith.constant 0 : index
    %c0_35 = arith.constant 0 : index
    %c0_36 = arith.constant 0 : index
    %72 = vector.load %arg4[%c0_34, %c0_35, %c0_36] : memref<1x64x128xf32, #tpu.memory_space<vmem>>, vector<1x64x128xf32>
    %73 = vector.shape_cast %72 : vector<1x64x128xf32> to vector<64x128xf32>
    %74 = vector.shape_cast %71 : vector<64x128xf32> to vector<1x64x128xf32>
    tpu.vector_store %arg4[%c0_34, %c0_35, %c0_36], %74 {strides = array<i32>} : memref<1x64x128xf32, #tpu.memory_space<vmem>>, vector<1x64x128xf32>,
    return
  }
  func.func @transform_0(%arg0: i32) -> (i32, i32, i32, i32) {
    %c0_i32 = arith.constant 0 : i32
    %c0_i32_0 = arith.constant 0 : i32
    %c0_i32_1 = arith.constant 0 : i32
    %c0_i32_2 = arith.constant 0 : i32
    return %arg0, %c0_i32, %c0_i32_0, %c0_i32_1 : i32, i32, i32, i32
  }
  func.func @transform_1(%arg0: i32) -> (i32, i32, i32) {
    %c0_i32 = arith.constant 0 : i32
    %c0_i32_0 = arith.constant 0 : i32
    %c0_i32_1 = arith.constant 0 : i32
    %c0_i32_2 = arith.constant 0 : i32
    return %c0_i32, %c0_i32_0, %c0_i32_1 : i32, i32, i32
  }
  func.func @transform_2(%arg0: i32) -> (i32, i32) {
    %c0_i32 = arith.constant 0 : i32
    %c0_i32_0 = arith.constant 0 : i32
    %c0_i32_1 = arith.constant 0 : i32
    return %c0_i32, %c0_i32_0 : i32, i32
  }
  func.func @transform_3(%arg0: i32) -> (i32, i32, i32) {
    %c0_i32 = arith.constant 0 : i32
    %c0_i32_0 = arith.constant 0 : i32
    %c0_i32_1 = arith.constant 0 : i32
    return %arg0, %c0_i32, %c0_i32_0 : i32, i32, i32
  }
}

module attributes {stable_mosaic.version = 11 : i64} {
  func.func @_conv3x3_kernel(%arg0: i32, %arg1: memref<1x10x10x128xbf16, #tpu.memory_space<vmem>>, %arg2: memref<9x128x128xbf16, #tpu.memory_space<vmem>>, %arg3: memref<1x128xf32, #tpu.memory_space<vmem>>, %arg4: memref<1x64x128xf32, #tpu.memory_space<vmem>>, %arg5: memref<1x64x128xf32, #tpu.memory_space<vmem>>) attributes {dimension_semantics = [#tpu.dimension_semantics<parallel>], iteration_bounds = array<i64: 2>, scalar_prefetch = 0 : i64, scratch_operands = 0 : i64, tpu.core_type = #tpu.core_type<tc>, window_params = [{transform_indices = @transform_0, window_bounds = array<i64: 1, 10, 10, 128>}, {pipeline_mode = #tpu.pipeline_mode<synchronous>, transform_indices = @transform_1, window_bounds = array<i64: 9, 128, 128>}, {pipeline_mode = #tpu.pipeline_mode<synchronous>, transform_indices = @transform_2, window_bounds = array<i64: 1, 128>}, {transform_indices = @transform_3, window_bounds = array<i64: 1, 64, 128>}, {transform_indices = @transform_4, window_bounds = array<i64: 1, 64, 128>}]} {
    %c0 = arith.constant 0 : index
    %c0_0 = arith.constant 0 : index
    %c0_1 = arith.constant 0 : index
    %c0_2 = arith.constant 0 : index
    %0 = vector.load %arg1[%c0, %c0_0, %c0_1, %c0_2] : memref<1x10x10x128xbf16, #tpu.memory_space<vmem>>, vector<1x10x10x128xbf16>
    %1 = vector.shape_cast %0 : vector<1x10x10x128xbf16> to vector<10x10x128xbf16>
    %2 = arith.extf %1 : vector<10x10x128xbf16> to vector<10x10x128xf32>
    %cst = arith.constant 0.000000e+00 : f32
    %3 = vector.broadcast %cst : f32 to vector<64x128xf32>
    %4 = vector.extract_strided_slice %2 {offsets = [0, 0, 0], sizes = [8, 8, 128], strides = [1, 1, 1]} : vector<10x10x128xf32> to vector<8x8x128xf32>
    %5 = vector.shape_cast %4 : vector<8x8x128xf32> to vector<64x128xf32>
    %6 = arith.truncf %5 : vector<64x128xf32> to vector<64x128xbf16>
    %c0_3 = arith.constant 0 : index
    %c0_4 = arith.constant 0 : index
    %c0_5 = arith.constant 0 : index
    %7 = vector.load %arg2[%c0_3, %c0_4, %c0_5] : memref<9x128x128xbf16, #tpu.memory_space<vmem>>, vector<1x128x128xbf16>
    %8 = vector.shape_cast %7 : vector<1x128x128xbf16> to vector<128x128xbf16>
    %cst_6 = arith.constant dense<0.000000e+00> : vector<64x128xf32>
    %9 = tpu.matmul %6, %8, %cst_6 {dimension_numbers = #tpu.dot_dimension_numbers<[1], [0], [0], [1], [0, 0, 1, 1], [], []>} : vector<64x128xbf16>, vector<128x128xbf16>, vector<64x128xf32> -> vector<64x128xf32>
    %10 = arith.addf %3, %9 : vector<64x128xf32>
    %11 = vector.extract_strided_slice %2 {offsets = [0, 1, 0], sizes = [8, 8, 128], strides = [1, 1, 1]} : vector<10x10x128xf32> to vector<8x8x128xf32>
    %12 = vector.shape_cast %11 : vector<8x8x128xf32> to vector<64x128xf32>
    %13 = arith.truncf %12 : vector<64x128xf32> to vector<64x128xbf16>
    %c1 = arith.constant 1 : index
    %c0_7 = arith.constant 0 : index
    %c0_8 = arith.constant 0 : index
    %14 = vector.load %arg2[%c1, %c0_7, %c0_8] : memref<9x128x128xbf16, #tpu.memory_space<vmem>>, vector<1x128x128xbf16>
    %15 = vector.shape_cast %14 : vector<1x128x128xbf16> to vector<128x128xbf16>
    %cst_9 = arith.constant dense<0.000000e+00> : vector<64x128xf32>
    %16 = tpu.matmul %13, %15, %cst_9 {dimension_numbers = #tpu.dot_dimension_numbers<[1], [0], [0], [1], [0, 0, 1, 1], [], []>} : vector<64x128xbf16>, vector<128x128xbf16>, vector<64x128xf32> -> vector<64x128xf32>
    %17 = arith.addf %10, %16 : vector<64x128xf32>
    %18 = vector.extract_strided_slice %2 {offsets = [0, 2, 0], sizes = [8, 8, 128], strides = [1, 1, 1]} : vector<10x10x128xf32> to vector<8x8x128xf32>
    %19 = vector.shape_cast %18 : vector<8x8x128xf32> to vector<64x128xf32>
    %20 = arith.truncf %19 : vector<64x128xf32> to vector<64x128xbf16>
    %c2 = arith.constant 2 : index
    %c0_10 = arith.constant 0 : index
    %c0_11 = arith.constant 0 : index
    %21 = vector.load %arg2[%c2, %c0_10, %c0_11] : memref<9x128x128xbf16, #tpu.memory_space<vmem>>, vector<1x128x128xbf16>
    %22 = vector.shape_cast %21 : vector<1x128x128xbf16> to vector<128x128xbf16>
    %cst_12 = arith.constant dense<0.000000e+00> : vector<64x128xf32>
    %23 = tpu.matmul %20, %22, %cst_12 {dimension_numbers = #tpu.dot_dimension_numbers<[1], [0], [0], [1], [0, 0, 1, 1], [], []>} : vector<64x128xbf16>, vector<128x128xbf16>, vector<64x128xf32> -> vector<64x128xf32>
    %24 = arith.addf %17, %23 : vector<64x128xf32>
    %25 = vector.extract_strided_slice %2 {offsets = [1, 0, 0], sizes = [8, 8, 128], strides = [1, 1, 1]} : vector<10x10x128xf32> to vector<8x8x128xf32>
    %26 = vector.shape_cast %25 : vector<8x8x128xf32> to vector<64x128xf32>
    %27 = arith.truncf %26 : vector<64x128xf32> to vector<64x128xbf16>
    %c3 = arith.constant 3 : index
    %c0_13 = arith.constant 0 : index
    %c0_14 = arith.constant 0 : index
    %28 = vector.load %arg2[%c3, %c0_13, %c0_14] : memref<9x128x128xbf16, #tpu.memory_space<vmem>>, vector<1x128x128xbf16>
    %29 = vector.shape_cast %28 : vector<1x128x128xbf16> to vector<128x128xbf16>
    %cst_15 = arith.constant dense<0.000000e+00> : vector<64x128xf32>
    %30 = tpu.matmul %27, %29, %cst_15 {dimension_numbers = #tpu.dot_dimension_numbers<[1], [0], [0], [1], [0, 0, 1, 1], [], []>} : vector<64x128xbf16>, vector<128x128xbf16>, vector<64x128xf32> -> vector<64x128xf32>
    %31 = arith.addf %24, %30 : vector<64x128xf32>
    %32 = vector.extract_strided_slice %2 {offsets = [1, 1, 0], sizes = [8, 8, 128], strides = [1, 1, 1]} : vector<10x10x128xf32> to vector<8x8x128xf32>
    %33 = vector.shape_cast %32 : vector<8x8x128xf32> to vector<64x128xf32>
    %34 = arith.truncf %33 : vector<64x128xf32> to vector<64x128xbf16>
    %c4 = arith.constant 4 : index
    %c0_16 = arith.constant 0 : index
    %c0_17 = arith.constant 0 : index
    %35 = vector.load %arg2[%c4, %c0_16, %c0_17] : memref<9x128x128xbf16, #tpu.memory_space<vmem>>, vector<1x128x128xbf16>
    %36 = vector.shape_cast %35 : vector<1x128x128xbf16> to vector<128x128xbf16>
    %cst_18 = arith.constant dense<0.000000e+00> : vector<64x128xf32>
    %37 = tpu.matmul %34, %36, %cst_18 {dimension_numbers = #tpu.dot_dimension_numbers<[1], [0], [0], [1], [0, 0, 1, 1], [], []>} : vector<64x128xbf16>, vector<128x128xbf16>, vector<64x128xf32> -> vector<64x128xf32>
    %38 = arith.addf %31, %37 : vector<64x128xf32>
    %39 = vector.extract_strided_slice %2 {offsets = [1, 2, 0], sizes = [8, 8, 128], strides = [1, 1, 1]} : vector<10x10x128xf32> to vector<8x8x128xf32>
    %40 = vector.shape_cast %39 : vector<8x8x128xf32> to vector<64x128xf32>
    %41 = arith.truncf %40 : vector<64x128xf32> to vector<64x128xbf16>
    %c5 = arith.constant 5 : index
    %c0_19 = arith.constant 0 : index
    %c0_20 = arith.constant 0 : index
    %42 = vector.load %arg2[%c5, %c0_19, %c0_20] : memref<9x128x128xbf16, #tpu.memory_space<vmem>>, vector<1x128x128xbf16>
    %43 = vector.shape_cast %42 : vector<1x128x128xbf16> to vector<128x128xbf16>
    %cst_21 = arith.constant dense<0.000000e+00> : vector<64x128xf32>
    %44 = tpu.matmul %41, %43, %cst_21 {dimension_numbers = #tpu.dot_dimension_numbers<[1], [0], [0], [1], [0, 0, 1, 1], [], []>} : vector<64x128xbf16>, vector<128x128xbf16>, vector<64x128xf32> -> vector<64x128xf32>
    %45 = arith.addf %38, %44 : vector<64x128xf32>
    %46 = vector.extract_strided_slice %2 {offsets = [2, 0, 0], sizes = [8, 8, 128], strides = [1, 1, 1]} : vector<10x10x128xf32> to vector<8x8x128xf32>
    %47 = vector.shape_cast %46 : vector<8x8x128xf32> to vector<64x128xf32>
    %48 = arith.truncf %47 : vector<64x128xf32> to vector<64x128xbf16>
    %c6 = arith.constant 6 : index
    %c0_22 = arith.constant 0 : index
    %c0_23 = arith.constant 0 : index
    %49 = vector.load %arg2[%c6, %c0_22, %c0_23] : memref<9x128x128xbf16, #tpu.memory_space<vmem>>, vector<1x128x128xbf16>
    %50 = vector.shape_cast %49 : vector<1x128x128xbf16> to vector<128x128xbf16>
    %cst_24 = arith.constant dense<0.000000e+00> : vector<64x128xf32>
    %51 = tpu.matmul %48, %50, %cst_24 {dimension_numbers = #tpu.dot_dimension_numbers<[1], [0], [0], [1], [0, 0, 1, 1], [], []>} : vector<64x128xbf16>, vector<128x128xbf16>, vector<64x128xf32> -> vector<64x128xf32>
    %52 = arith.addf %45, %51 : vector<64x128xf32>
    %53 = vector.extract_strided_slice %2 {offsets = [2, 1, 0], sizes = [8, 8, 128], strides = [1, 1, 1]} : vector<10x10x128xf32> to vector<8x8x128xf32>
    %54 = vector.shape_cast %53 : vector<8x8x128xf32> to vector<64x128xf32>
    %55 = arith.truncf %54 : vector<64x128xf32> to vector<64x128xbf16>
    %c7 = arith.constant 7 : index
    %c0_25 = arith.constant 0 : index
    %c0_26 = arith.constant 0 : index
    %56 = vector.load %arg2[%c7, %c0_25, %c0_26] : memref<9x128x128xbf16, #tpu.memory_space<vmem>>, vector<1x128x128xbf16>
    %57 = vector.shape_cast %56 : vector<1x128x128xbf16> to vector<128x128xbf16>
    %cst_27 = arith.constant dense<0.000000e+00> : vector<64x128xf32>
    %58 = tpu.matmul %55, %57, %cst_27 {dimension_numbers = #tpu.dot_dimension_numbers<[1], [0], [0], [1], [0, 0, 1, 1], [], []>} : vector<64x128xbf16>, vector<128x128xbf16>, vector<64x128xf32> -> vector<64x128xf32>
    %59 = arith.addf %52, %58 : vector<64x128xf32>
    %60 = vector.extract_strided_slice %2 {offsets = [2, 2, 0], sizes = [8, 8, 128], strides = [1, 1, 1]} : vector<10x10x128xf32> to vector<8x8x128xf32>
    %61 = vector.shape_cast %60 : vector<8x8x128xf32> to vector<64x128xf32>
    %62 = arith.truncf %61 : vector<64x128xf32> to vector<64x128xbf16>
    %c8 = arith.constant 8 : index
    %c0_28 = arith.constant 0 : index
    %c0_29 = arith.constant 0 : index
    %63 = vector.load %arg2[%c8, %c0_28, %c0_29] : memref<9x128x128xbf16, #tpu.memory_space<vmem>>, vector<1x128x128xbf16>
    %64 = vector.shape_cast %63 : vector<1x128x128xbf16> to vector<128x128xbf16>
    %cst_30 = arith.constant dense<0.000000e+00> : vector<64x128xf32>
    %65 = tpu.matmul %62, %64, %cst_30 {dimension_numbers = #tpu.dot_dimension_numbers<[1], [0], [0], [1], [0, 0, 1, 1], [], []>} : vector<64x128xbf16>, vector<128x128xbf16>, vector<64x128xf32> -> vector<64x128xf32>
    %66 = arith.addf %59, %65 : vector<64x128xf32>
    %c0_31 = arith.constant 0 : index
    %c0_32 = arith.constant 0 : index
    %67 = vector.load %arg3[%c0_31, %c0_32] : memref<1x128xf32, #tpu.memory_space<vmem>>, vector<1x128xf32>
    %68 = vector.broadcast %67 : vector<1x128xf32> to vector<64x128xf32>
    %69 = arith.addf %66, %68 : vector<64x128xf32>
    %c0_33 = arith.constant 0 : index
    %c0_34 = arith.constant 0 : index
    %c0_35 = arith.constant 0 : index
    %70 = vector.load %arg4[%c0_33, %c0_34, %c0_35] : memref<1x64x128xf32, #tpu.memory_space<vmem>>, vector<1x64x128xf32>
    %71 = vector.shape_cast %70 : vector<1x64x128xf32> to vector<64x128xf32>
    %72 = arith.addf %69, %71 : vector<64x128xf32>
    %cst_36 = arith.constant 0.000000e+00 : f32
    %73 = vector.broadcast %cst_36 : f32 to vector<64x128xf32>
    %74 = arith.maximumf %72, %73 : vector<64x128xf32>
    %c0_37 = arith.constant 0 : index
    %c0_38 = arith.constant 0 : index
    %c0_39 = arith.constant 0 : index
    %75 = vector.load %arg5[%c0_37, %c0_38, %c0_39] : memref<1x64x128xf32, #tpu.memory_space<vmem>>, vector<1x64x128xf32>
    %76 = vector.shape_cast %75 : vector<1x64x128xf32> to vector<64x128xf32>
    %77 = vector.shape_cast %74 : vector<64x128xf32> to vector<1x64x128xf32>
    tpu.vector_store %arg5[%c0_37, %c0_38, %c0_39], %77 {strides = array<i32>} : memref<1x64x128xf32, #tpu.memory_space<vmem>>, vector<1x64x128xf32>,
    return
  }
  func.func @transform_0(%arg0: i32) -> (i32, i32, i32, i32) {
    %c0_i32 = arith.constant 0 : i32
    %c0_i32_0 = arith.constant 0 : i32
    %c0_i32_1 = arith.constant 0 : i32
    %c0_i32_2 = arith.constant 0 : i32
    return %arg0, %c0_i32, %c0_i32_0, %c0_i32_1 : i32, i32, i32, i32
  }
  func.func @transform_1(%arg0: i32) -> (i32, i32, i32) {
    %c0_i32 = arith.constant 0 : i32
    %c0_i32_0 = arith.constant 0 : i32
    %c0_i32_1 = arith.constant 0 : i32
    %c0_i32_2 = arith.constant 0 : i32
    return %c0_i32, %c0_i32_0, %c0_i32_1 : i32, i32, i32
  }
  func.func @transform_2(%arg0: i32) -> (i32, i32) {
    %c0_i32 = arith.constant 0 : i32
    %c0_i32_0 = arith.constant 0 : i32
    %c0_i32_1 = arith.constant 0 : i32
    return %c0_i32, %c0_i32_0 : i32, i32
  }
  func.func @transform_3(%arg0: i32) -> (i32, i32, i32) {
    %c0_i32 = arith.constant 0 : i32
    %c0_i32_0 = arith.constant 0 : i32
    %c0_i32_1 = arith.constant 0 : i32
    return %arg0, %c0_i32, %c0_i32_0 : i32, i32, i32
  }
  func.func @transform_4(%arg0: i32) -> (i32, i32, i32) {
    %c0_i32 = arith.constant 0 : i32
    %c0_i32_0 = arith.constant 0 : i32
    %c0_i32_1 = arith.constant 0 : i32
    return %arg0, %c0_i32, %c0_i32_0 : i32, i32, i32
  }
}

</mosaic_0001>

<llo_original>
// kernel: res_down_block.2
$region0: #{res_down_block.2}
  #allocation0 [shape = 'u32[]', space=smem, size = 0x4, offset = 0x4, fixed_abs, tag = 'smem constant byte address 0x4 - core index']
  #allocation1 [shape = 'u32[144,128]{1,0:T(1,128)}', space=vmem, size = 0x12000, scoped, tag = 'internal scratch']
  %s0 = inlined_call_operand.vmem [shape: bf16[2,36,9,4], index: 0, kind: input, shape index: {}]
  %s1 = inlined_call_operand.vmem [shape: bf16[9,4,128], index: 1, kind: input, shape index: {}]
  %s2 = inlined_call_operand.vmem [shape: f32[1,128], index: 2, kind: input, shape index: {}]
  %s3 = inlined_call_operand.vmem [shape: f32[2,64,128], index: 3, kind: output, shape index: {}]
  %s4 = sld [smem:[#allocation0]]
  $region45: #{res_down_block.2} parent=0
    _
  %s6 = ssub.s32 1, %s4
  %s7 = scalar_select 0, %s6, %s4
  loop: start=0, step=1, limit=4
  $region2: #{res_down_block.2} parent=0 // loop_pre_header
    _
  $region3: #{res_down_block.2} parent=0 // loop_header
    %s9 = sphi 0, %s13
    %p10 = scmp.ge.s32.totalorder %s9, 4
    %s19 = sphi 0, %s21
    %s22 = sphi 0, %s19
    %s23 = sphi 0, %s22
    %s39 = sphi 0, %s23
    %s43 = sphi 0, %s43
    %s45 = sphi 0, %s43
    %s46 = sphi 0, %s45
    %s60 = sphi 0, %s46
    %s64 = sphi 0, %s64
    %s66 = sphi 0, %s64
    %s67 = sphi 0, %s66
    %s81 = sphi 0, %s67
    %s87 = sphi 0, %s89
    %s90 = sphi 0, %s87
    %s91 = sphi 0, %s90
    %s107 = sphi 0, %s91
  $region4: #{res_down_block.2} parent=0 // loop_header_branch
    %12 = sbr.rel (%p10) target = $region8
  $region5: #{res_down_block.2} parent=0 // loop_body
    %s14 = ssub.s32 %s9, 1
    %s15 = ssub.s32 %s9, 2
    %s16 = sadd.s32 %s9, 1
    %s17 = ssub.s32 %s9, %s16
    %p18 = scmp.eq.s32.totalorder %s17, 0
    %s20 = sadd.s32 %s19, 1
    %s21 = scalar_select %p18, %s19, %s20
    %p24 = pneg %p18
    %p25 = scmp.eq.s32.totalorder %s9, 1
    %p26 = por %p24, %p25
    %p27 = scmp.ne.s32.totalorder %s19, %s22
    %p28 = scmp.eq.s32.totalorder %s9, 0
    %p29 = por %p27, %p28
    %p30 = scmp.ne.s32.totalorder %s19, %s22
    %p31 = scmp.eq.s32.totalorder %s14, 1
    %p32 = por %p30, %p31
    %p33 = scmp.ne.s32.totalorder %s22, %s23
    %p34 = scmp.eq.s32.totalorder %s14, 0
    %p35 = por %p33, %p34
    %p36 = scmp.ne.s32.totalorder %s22, %s23
    %p37 = scmp.eq.s32.totalorder %s15, 1
    %p38 = por %p36, %p37
    %p40 = scmp.ne.s32.totalorder %s23, %s39
    %p41 = scmp.eq.s32.totalorder %s15, 0
    %p42 = por %p40, %p41
    %s44 = sadd.s32 %s43, 1
    %p47 = scmp.eq.s32.totalorder %s9, 1
    %p48 = scmp.ne.s32.totalorder %s43, %s45
    %p49 = scmp.eq.s32.totalorder %s9, 0
    %p50 = por %p48, %p49
    %p51 = scmp.ne.s32.totalorder %s43, %s45
    %p52 = scmp.eq.s32.totalorder %s14, 1
    %p53 = por %p51, %p52
    %p54 = scmp.ne.s32.totalorder %s45, %s46
    %p55 = scmp.eq.s32.totalorder %s14, 0
    %p56 = por %p54, %p55
    %p57 = scmp.ne.s32.totalorder %s45, %s46
    %p58 = scmp.eq.s32.totalorder %s15, 1
    %p59 = por %p57, %p58
    %p61 = scmp.ne.s32.totalorder %s46, %s60
    %p62 = scmp.eq.s32.totalorder %s15, 0
    %p63 = por %p61, %p62
    %s65 = sadd.s32 %s64, 1
    %p68 = scmp.eq.s32.totalorder %s9, 1
    %p69 = scmp.ne.s32.totalorder %s64, %s66
    %p70 = scmp.eq.s32.totalorder %s9, 0
    %p71 = por %p69, %p70
    %p72 = scmp.ne.s32.totalorder %s64, %s66
    %p73 = scmp.eq.s32.totalorder %s14, 1
    %p74 = por %p72, %p73
    %p75 = scmp.ne.s32.totalorder %s66, %s67
    %p76 = scmp.eq.s32.totalorder %s14, 0
    %p77 = por %p75, %p76
    %p78 = scmp.ne.s32.totalorder %s66, %s67
    %p79 = scmp.eq.s32.totalorder %s15, 1
    %p80 = por %p78, %p79
    %p82 = scmp.ne.s32.totalorder %s67, %s81
    %p83 = scmp.eq.s32.totalorder %s15, 0
    %p84 = por %p82, %p83
    %s85 = ssub.s32 %s9, %s16
    %p86 = scmp.eq.s32.totalorder %s85, 0
    %s88 = sadd.s32 %s87, 1
    %s89 = scalar_select %p86, %s87, %s88
    %p92 = pneg %p86
    %p93 = scmp.eq.s32.totalorder %s9, 1
    %p94 = por %p92, %p93
    %p95 = scmp.ne.s32.totalorder %s87, %s90
    %p96 = scmp.eq.s32.totalorder %s9, 0
    %p97 = por %p95, %p96
    %p98 = scmp.ne.s32.totalorder %s87, %s90
    %p99 = scmp.eq.s32.totalorder %s14, 1
    %p100 = por %p98, %p99
    %p101 = scmp.ne.s32.totalorder %s90, %s91
    %p102 = scmp.eq.s32.totalorder %s14, 0
    %p103 = por %p101, %p102
    %p104 = scmp.ne.s32.totalorder %s90, %s91
    %p105 = scmp.eq.s32.totalorder %s15, 1
    %p106 = por %p104, %p105
    %p108 = scmp.ne.s32.totalorder %s91, %s107
    %p109 = scmp.eq.s32.totalorder %s15, 0
    %p110 = por %p108, %p109
    %p111 = scmp.le.s32.totalorder 1, %s9
    %p112 = scmp.lt.s32.totalorder %s9, 3
    %p113 = pnand %p111, %p112
    %p114 = pneg %p113
    // Predicated region
    $region9: #{res_down_block.2} parent=5 // pred_check
      _
    $region10: #{res_down_block.2} parent=5 // pred_check_branch
      %116 = sbr.rel (%p113) target = $region12
    $region11: #{res_down_block.2} parent=5 // pred_region
      %s117 = ssub.s32 %s9, 1
      // Predicated region
      $region13: #{res_down_block.2} parent=11 // pred_check
        %p118 = pneg %p56
      $region14: #{res_down_block.2} parent=11 // pred_check_branch
        %120 = sbr.rel (%p118) target = $region16
      $region15: #{res_down_block.2} parent=11 // pred_region
        _
      $region16: #{res_down_block.2} parent=11 // pred_fallthru
        _
      // Predicated region
      $region17: #{res_down_block.2} parent=11 // pred_check
        %p121 = pneg %p77
      $region18: #{res_down_block.2} parent=11 // pred_check_branch
        %123 = sbr.rel (%p121) target = $region20
      $region19: #{res_down_block.2} parent=11 // pred_region
        _
      $region20: #{res_down_block.2} parent=11 // pred_fallthru
        _
    $region12: #{res_down_block.2} parent=5 // pred_fallthru
      _
    %p124 = scmp.lt.s32.totalorder %s9, 2
    // Predicated region
    $region21: #{res_down_block.2} parent=5 // pred_check
      %p125 = pneg %p124
    $region22: #{res_down_block.2} parent=5 // pred_check_branch
      %127 = sbr.rel (%p125) target = $region24
    $region23: #{res_down_block.2} parent=5 // pred_region
      // Predicated region
      $region25: #{res_down_block.2} parent=23 // pred_check
        %p128 = pneg %p29
      $region26: #{res_down_block.2} parent=23 // pred_check_branch
        %130 = sbr.rel (%p128) target = $region28
      $region27: #{res_down_block.2} parent=23 // pred_region
        %p131 = scmp.lt.s32.totalorder %s9, 1
        %s132 = scalar_select %p131, %s9, 1
        %s133 = smul.addr %s132, 72
        %s134 = smul.addr %s133, 4
        %s135 = scalar_lea.vmem %s0, %s134
      $region28: #{res_down_block.2} parent=23 // pred_fallthru
        _
    $region24: #{res_down_block.2} parent=5 // pred_fallthru
      _
    %p136 = scmp.le.s32.totalorder 1, %s9
    %p137 = scmp.lt.s32.totalorder %s9, 3
    %p138 = pnand %p136, %p137
    %p139 = pneg %p138
    // Predicated region
    $region29: #{res_down_block.2} parent=5 // pred_check
      _
    $region30: #{res_down_block.2} parent=5 // pred_check_branch
      %141 = sbr.rel (%p138) target = $region32
    $region31: #{res_down_block.2} parent=5 // pred_region
      %s142 = ssub.s32 %s9, 1
      %p143 = scmp.lt.s32.totalorder %s14, 1
      %s144 = scalar_select %p143, %s14, 1
      %s145 = smul.addr %s144, 72
      %s146 = smul.addr %s145, 4
      %s147 = scalar_lea.vmem %s0, %s146
      %p148 = pneg %p35
      %p149 = pneg %p32
      %p150 = pneg %p56
      %p151 = pneg %p53
      %p152 = pneg %p77
      %p153 = pneg %p74
      %p154 = pneg %p103
      %p155 = pneg %p100
      %p156 = scmp.lt.s32.totalorder %s14, 1
      %s157 = scalar_select %p156, %s14, 1
      %s158 = smul.addr %s157, 8
      %s159 = smul.addr %s158, 8
      %s160 = scalar_lea.vmem %s3, %s159
      %p161 = scmp.lt.s32.totalorder %s14, 1
      %s162 = scalar_select %p161, %s14, 1
      %s163 = smul.addr %s162, 72
      %s164 = smul.addr %s163, 4
      %s165 = scalar_lea.vmem %s0, %s164
      %p166 = scmp.lt.s32.totalorder %s14, 1
      %s167 = scalar_select %p166, %s14, 1
      %s168 = smul.addr %s167, 8
      %s169 = smul.addr %s168, 8
      %s170 = scalar_lea.vmem %s3, %s169
      %v172 = vld [vmem:[%s165] sm:$0xf]
      %v173 = vld [vmem:[%s165 + $0x4] sm:$0x1]
      %v174 = vld [vmem:[%s165 + $0x8] sm:$0xf]
      %v175 = vld [vmem:[%s165 + $0xc] sm:$0x1]
      %v176 = vld [vmem:[%s165 + $0x10] sm:$0xf]
      %v177 = vld [vmem:[%s165 + $0x14] sm:$0x1]
      %v178 = vld [vmem:[%s165 + $0x18] sm:$0xf]
      %v179 = vld [vmem:[%s165 + $0x1c] sm:$0x1]
      %v180 = vld [vmem:[%s165 + $0x20] sm:$0xf]
      %v181 = vld [vmem:[%s165 + $0x24] sm:$0x1]
      %v182 = vld [vmem:[%s165 + $0x28] sm:$0xf]
      %v183 = vld [vmem:[%s165 + $0x2c] sm:$0x1]
      %v184 = vld [vmem:[%s165 + $0x30] sm:$0xf]
      %v185 = vld [vmem:[%s165 + $0x34] sm:$0x1]
      %v186 = vld [vmem:[%s165 + $0x38] sm:$0xf]
      %v187 = vld [vmem:[%s165 + $0x3c] sm:$0x1]
      %v188 = vld [vmem:[%s165 + $0x40] sm:$0xf]
      %v189 = vld [vmem:[%s165 + $0x44] sm:$0x1]
      %v190 = vld [vmem:[%s165 + $0x48] sm:$0xf]
      %v191 = vld [vmem:[%s165 + $0x50] sm:$0xf]
      %v192 = vld [vmem:[%s165 + $0x58] sm:$0xf]
      %v193 = vld [vmem:[%s165 + $0x60] sm:$0xf]
      %v194 = vld [vmem:[%s165 + $0x68] sm:$0xf]
      %v195 = vld [vmem:[%s165 + $0x70] sm:$0xf]
      %v196 = vld [vmem:[%s165 + $0x78] sm:$0xf]
      %v197 = vld [vmem:[%s165 + $0x80] sm:$0xf]
      %v198 = vld [vmem:[%s165 + $0x88] sm:$0xf]
      %v199 = vld [vmem:[%s165 + $0x90] sm:$0xf]
      %v200 = vld [vmem:[%s165 + $0x94] sm:$0x1]
      %v201 = vld [vmem:[%s165 + $0x98] sm:$0xf]
      %v202 = vld [vmem:[%s165 + $0x9c] sm:$0x1]
      %v203 = vld [vmem:[%s165 + $0xa0] sm:$0xf]
      %v204 = vld [vmem:[%s165 + $0xa4] sm:$0x1]
      %v205 = vld [vmem:[%s165 + $0xa8] sm:$0xf]
      %v206 = vld [vmem:[%s165 + $0xac] sm:$0x1]
      %v207 = vld [vmem:[%s165 + $0xb0] sm:$0xf]
      %v208 = vld [vmem:[%s165 + $0xb4] sm:$0x1]
      %v209 = vld [vmem:[%s165 + $0xb8] sm:$0xf]
      %v210 = vld [vmem:[%s165 + $0xbc] sm:$0x1]
      %v211 = vld [vmem:[%s165 + $0xc0] sm:$0xf]
      %v212 = vld [vmem:[%s165 + $0xc4] sm:$0x1]
      %v213 = vld [vmem:[%s165 + $0xc8] sm:$0xf]
      %v214 = vld [vmem:[%s165 + $0xcc] sm:$0x1]
      %v215 = vld [vmem:[%s165 + $0xd8] sm:$0xf]
      %v216 = vld [vmem:[%s165 + $0xe0] sm:$0xf]
      %v217 = vld [vmem:[%s165 + $0xe8] sm:$0xf]
      %v218 = vld [vmem:[%s165 + $0xf0] sm:$0xf]
      %v219 = vld [vmem:[%s165 + $0xf8] sm:$0xf]
      %v220 = vld [vmem:[%s165 + $0x100] sm:$0xf]
      %v221 = vld [vmem:[%s165 + $0x108] sm:$0xf]
      %v222 = vld [vmem:[%s165 + $0x110] sm:$0xf]
      %v223 = vunpack.c.l.bf16 %v172
      %v224 = vunpack.c.l.bf16 %v173
      %v225 = vunpack.c.l.bf16 %v174
      %v226 = vunpack.c.l.bf16 %v175
      %v227 = vunpack.c.l.bf16 %v176
      %v228 = vunpack.c.l.bf16 %v177
      %v229 = vunpack.c.l.bf16 %v178
      %v230 = vunpack.c.l.bf16 %v179
      %v231 = vunpack.c.l.bf16 %v180
      %v232 = vunpack.c.l.bf16 %v181
      %v233 = vunpack.c.l.bf16 %v182
      %v234 = vunpack.c.l.bf16 %v183
      %v235 = vunpack.c.l.bf16 %v184
      %v236 = vunpack.c.l.bf16 %v185
      %v237 = vunpack.c.l.bf16 %v186
      %v238 = vunpack.c.l.bf16 %v187
      %v239 = vunpack.c.l.bf16 %v188
      %v240 = vunpack.c.l.bf16 %v189
      %v241 = vunpack.c.l.bf16 %v190
      %v242 = vunpack.c.l.bf16 %v191
      %v243 = vunpack.c.l.bf16 %v192
      %v244 = vunpack.c.l.bf16 %v193
      %v245 = vunpack.c.l.bf16 %v194
      %v246 = vunpack.c.l.bf16 %v195
      %v247 = vunpack.c.l.bf16 %v196
      %v248 = vunpack.c.l.bf16 %v197
      %v249 = vunpack.c.l.bf16 %v198
      %v250 = vunpack.c.l.bf16 %v199
      %v251 = vunpack.c.l.bf16 %v200
      %v252 = vunpack.c.l.bf16 %v201
      %v253 = vunpack.c.l.bf16 %v202
      %v254 = vunpack.c.l.bf16 %v203
      %v255 = vunpack.c.l.bf16 %v204
      %v256 = vunpack.c.l.bf16 %v205
      %v257 = vunpack.c.l.bf16 %v206
      %v258 = vunpack.c.l.bf16 %v207
      %v259 = vunpack.c.l.bf16 %v208
      %v260 = vunpack.c.l.bf16 %v209
      %v261 = vunpack.c.l.bf16 %v210
      %v262 = vunpack.c.l.bf16 %v211
      %v263 = vunpack.c.l.bf16 %v212
      %v264 = vunpack.c.l.bf16 %v213
      %v265 = vunpack.c.l.bf16 %v214
      %v266 = vunpack.c.l.bf16 %v215
      %v267 = vunpack.c.l.bf16 %v216
      %v268 = vunpack.c.l.bf16 %v217
      %v269 = vunpack.c.l.bf16 %v218
      %v270 = vunpack.c.l.bf16 %v219
      %v271 = vunpack.c.l.bf16 %v220
      %v272 = vunpack.c.l.bf16 %v221
      %v273 = vunpack.c.l.bf16 %v222
      %v274 = vpack.c.bf16 %v225, %v223
      %v275 = vpack.c.bf16 %v229, %v227
      %v276 = vpack.c.bf16 %v233, %v231
      %v277 = vpack.c.bf16 %v237, %v235
      %v278 = vld [vmem:[%s1] sm:$0x3]
      %v279 = vpack.c.bf16 %v242, %v241
      %v280 = vpack.c.bf16 %v244, %v243
      %v281 = vpack.c.bf16 %v246, %v245
      %v282 = vpack.c.bf16 %v248, %v247
      %s283 = scalar_lea.vmem %s1, 2
      %v284 = vld [vmem:[%s283] sm:$0x3]
      %vm285 = vcmask 31744
      %v287 = vsel %vm285, %v279, 0
      %v290 = vsel %vm285, %v280, 0
      %v293 = vsel %vm285, %v281, 0
      %v296 = vsel %vm285, %v282, 0
      %vm298 = vcmask 1041408
      %v300 = vsel %vm298, %v284, 0
      %302 = vmatprep.subr.bf16.mxu0 0
      %303 = vmatpush1.bf16.msra.mxu0 %v300
      %304 = vmatprep.subr.bf16.mxu0 0
      %305 = vmatpush1.bf16.msra.mxu0 0
      %306 = vmatprep.subr.bf16.mxu0 0
      %307 = vmatpush1.bf16.msra.mxu0 0
      %308 = vmatprep.subr.bf16.mxu0 0
      %309 = vmatpush1.bf16.msra.mxu0 0
      %310 = vmatprep.subr.bf16.mxu0 0
      %311 = vmatpush1.bf16.msra.mxu0 0
      %312 = vmatprep.subr.bf16.mxu0 0
      %313 = vmatpush1.bf16.msra.mxu0 0
      %314 = vmatprep.subr.bf16.mxu0 0
      %315 = vmatpush1.bf16.msra.mxu0 0
      %316 = vmatprep.subr.bf16.mxu0 0
      %317 = vmatpush1.bf16.msra.mxu0 0
      %318 = vmatprep.subr.bf16.mxu0 0
      %319 = vmatpush1.bf16.msra.mxu0 0
      %320 = vmatprep.subr.bf16.mxu0 0
      %321 = vmatpush1.bf16.msra.mxu0 0
      %322 = vmatprep.subr.bf16.mxu0 0
      %323 = vmatpush1.bf16.msra.mxu0 0
      %324 = vmatprep.subr.bf16.mxu0 0
      %325 = vmatpush1.bf16.msra.mxu0 0
      %326 = vmatprep.subr.bf16.mxu0 0
      %327 = vmatpush1.bf16.msra.mxu0 0
      %328 = vmatprep.subr.bf16.mxu0 0
      %329 = vmatpush1.bf16.msra.mxu0 0
      %330 = vmatprep.subr.bf16.mxu0 0
      %331 = vmatpush1.bf16.msra.mxu0 0
      %332 = vmatprep.subr.bf16.mxu0 0
      %333 = vmatpush1.bf16.msra.mxu0 0
      %334 = vmatprep.mubr.bf16.mxu0 0
      %335 = vmatmul.mubr.bf16.gmra.mrb[0].mxu0 %v287
      %v336 = vpop.f32.mrb[0].mxu0
      %v337 = vadd.f32 0.0, %v336
      %v338 = vpop.f32.mrb[0].mxu0
      %v339 = vpop.f32.mrb[0].mxu0
      %v340 = vadd.f32 0.0, %v339
      %v341 = vpop.f32.mrb[0].mxu0
      %342 = vmatprep.mubr.bf16.mxu0 0
      %343 = vmatmul.mubr.bf16.gmra.mrb[0].mxu0 %v290
      %v344 = vpop.f32.mrb[0].mxu0
      %v345 = vadd.f32 0.0, %v344
      %v346 = vpop.f32.mrb[0].mxu0
      %v347 = vpop.f32.mrb[0].mxu0
      %v348 = vadd.f32 0.0, %v347
      %v349 = vpop.f32.mrb[0].mxu0
      %350 = vmatprep.mubr.bf16.mxu0 0
      %351 = vmatmul.mubr.bf16.gmra.mrb[0].mxu0 %v293
      %v352 = vpop.f32.mrb[0].mxu0
      %v353 = vadd.f32 0.0, %v352
      %v354 = vpop.f32.mrb[0].mxu0
      %v355 = vpop.f32.mrb[0].mxu0
      %v356 = vadd.f32 0.0, %v355
      %v357 = vpop.f32.mrb[0].mxu0
      %358 = vmatprep.mubr.bf16.mxu0 0
      %359 = vmatmul.mubr.bf16.gmra.mrb[0].mxu0 %v296
      %v360 = vpop.f32.mrb[0].mxu0
      %v361 = vadd.f32 0.0, %v360
      %v362 = vpop.f32.mrb[0].mxu0
      %v363 = vpop.f32.mrb[0].mxu0
      %v364 = vadd.f32 0.0, %v363
      %v365 = vpop.f32.mrb[0].mxu0
      %366 = vdwg.mxu0
      %v368 = vsel %vm285, %v274, 0
      %v371 = vsel %vm285, %v275, 0
      %v374 = vsel %vm285, %v276, 0
      %v377 = vsel %vm285, %v277, 0
      %v380 = vsel %vm298, %v278, 0
      %382 = vmatprep.subr.bf16.mxu0 0
      %383 = vmatpush1.bf16.msra.mxu0 %v380
      %384 = vmatprep.subr.bf16.mxu0 0
      %385 = vmatpush1.bf16.msra.mxu0 0
      %386 = vmatprep.subr.bf16.mxu0 0
      %387 = vmatpush1.bf16.msra.mxu0 0
      %388 = vmatprep.subr.bf16.mxu0 0
      %389 = vmatpush1.bf16.msra.mxu0 0
      %390 = vmatprep.subr.bf16.mxu0 0
      %391 = vmatpush1.bf16.msra.mxu0 0
      %392 = vmatprep.subr.bf16.mxu0 0
      %393 = vmatpush1.bf16.msra.mxu0 0
      %394 = vmatprep.subr.bf16.mxu0 0
      %395 = vmatpush1.bf16.msra.mxu0 0
      %396 = vmatprep.subr.bf16.mxu0 0
      %397 = vmatpush1.bf16.msra.mxu0 0
      %398 = vmatprep.subr.bf16.mxu0 0
      %399 = vmatpush1.bf16.msra.mxu0 0
      %400 = vmatprep.subr.bf16.mxu0 0
      %401 = vmatpush1.bf16.msra.mxu0 0
      %402 = vmatprep.subr.bf16.mxu0 0
      %403 = vmatpush1.bf16.msra.mxu0 0
      %404 = vmatprep.subr.bf16.mxu0 0
      %405 = vmatpush1.bf16.msra.mxu0 0
      %406 = vmatprep.subr.bf16.mxu0 0
      %407 = vmatpush1.bf16.msra.mxu0 0
      %408 = vmatprep.subr.bf16.mxu0 0
      %409 = vmatpush1.bf16.msra.mxu0 0
      %410 = vmatprep.subr.bf16.mxu0 0
      %411 = vmatpush1.bf16.msra.mxu0 0
      %412 = vmatprep.subr.bf16.mxu0 0
      %413 = vmatpush1.bf16.msra.mxu0 0
      %414 = vmatprep.mubr.bf16.mxu0 0
      %415 = vmatmul.mubr.bf16.gmra.mrb[0].mxu0 %v368
      %v416 = vpop.f32.mrb[0].mxu0
      %v417 = vadd.f32 %v337, %v416
      %v418 = vpop.f32.mrb[0].mxu0
      %v419 = vpop.f32.mrb[0].mxu0
      %v420 = vadd.f32 %v340, %v419
      %v421 = vpop.f32.mrb[0].mxu0
      %422 = vmatprep.mubr.bf16.mxu0 0
      %423 = vmatmul.mubr.bf16.gmra.mrb[0].mxu0 %v371
      %v424 = vpop.f32.mrb[0].mxu0
      %v425 = vadd.f32 %v345, %v424
      %v426 = vpop.f32.mrb[0].mxu0
      %v427 = vpop.f32.mrb[0].mxu0
      %v428 = vadd.f32 %v348, %v427
      %v429 = vpop.f32.mrb[0].mxu0
      %430 = vmatprep.mubr.bf16.mxu0 0
      %431 = vmatmul.mubr.bf16.gmra.mrb[0].mxu0 %v374
      %v432 = vpop.f32.mrb[0].mxu0
      %v433 = vadd.f32 %v353, %v432
      %v434 = vpop.f32.mrb[0].mxu0
      %v435 = vpop.f32.mrb[0].mxu0
      %v436 = vadd.f32 %v356, %v435
      %v437 = vpop.f32.mrb[0].mxu0
      %438 = vmatprep.mubr.bf16.mxu0 0
      %439 = vmatmul.mubr.bf16.gmra.mrb[0].mxu0 %v377
      %v440 = vpop.f32.mrb[0].mxu0
      %v441 = vadd.f32 %v361, %v440
      %v442 = vpop.f32.mrb[0].mxu0
      %v443 = vpop.f32.mrb[0].mxu0
      %v444 = vadd.f32 %v364, %v443
      %v445 = vpop.f32.mrb[0].mxu0
      %446 = vdwg.mxu0
      %vm463 = vcmask 1046528
      %v464 = vrot.slane %v223, 1
      %v465 = vrot.slane %v224, 1
      %v466 = vsel %vm463, %v464, %v465
      %v467 = vrot.slane %v225, 1
      %v468 = vrot.slane %v226, 1
      %v469 = vsel %vm463, %v467, %v468
      %v470 = vrot.slane %v227, 1
      %v471 = vrot.slane %v228, 1
      %v472 = vsel %vm463, %v470, %v471
      %v473 = vrot.slane %v229, 1
      %v474 = vrot.slane %v230, 1
      %v475 = vsel %vm463, %v473, %v474
      %v476 = vrot.slane %v231, 1
      %v477 = vrot.slane %v232, 1
      %v478 = vsel %vm463, %v476, %v477
      %v479 = vrot.slane %v233, 1
      %v480 = vrot.slane %v234, 1
      %v481 = vsel %vm463, %v479, %v480
      %v482 = vrot.slane %v235, 1
      %v483 = vrot.slane %v236, 1
      %v484 = vsel %vm463, %v482, %v483
      %v485 = vrot.slane %v237, 1
      %v486 = vrot.slane %v238, 1
      %v487 = vsel %vm463, %v485, %v486
      %v496 = vpack.c.bf16 %v469, %v466
      %v497 = vpack.c.bf16 %v475, %v472
      %v498 = vpack.c.bf16 %v481, %v478
      %v499 = vpack.c.bf16 %v487, %v484
      %s500 = scalar_lea.vmem %s1, 4
      %v501 = vld [vmem:[%s500] sm:$0x3]
      %v503 = vsel %vm285, %v496, 0
      %v506 = vsel %vm285, %v497, 0
      %v509 = vsel %vm285, %v498, 0
      %v512 = vsel %vm285, %v499, 0
      %v515 = vsel %vm298, %v501, 0
      %517 = vmatprep.subr.bf16.mxu0 0
      %518 = vmatpush1.bf16.msra.mxu0 %v515
      %519 = vmatprep.subr.bf16.mxu0 0
      %520 = vmatpush1.bf16.msra.mxu0 0
      %521 = vmatprep.subr.bf16.mxu0 0
      %522 = vmatpush1.bf16.msra.mxu0 0
      %523 = vmatprep.subr.bf16.mxu0 0
      %524 = vmatpush1.bf16.msra.mxu0 0
      %525 = vmatprep.subr.bf16.mxu0 0
      %526 = vmatpush1.bf16.msra.mxu0 0
      %527 = vmatprep.subr.bf16.mxu0 0
      %528 = vmatpush1.bf16.msra.mxu0 0
      %529 = vmatprep.subr.bf16.mxu0 0
      %530 = vmatpush1.bf16.msra.mxu0 0
      %531 = vmatprep.subr.bf16.mxu0 0
      %532 = vmatpush1.bf16.msra.mxu0 0
      %533 = vmatprep.subr.bf16.mxu0 0
      %534 = vmatpush1.bf16.msra.mxu0 0
      %535 = vmatprep.subr.bf16.mxu0 0
      %536 = vmatpush1.bf16.msra.mxu0 0
      %537 = vmatprep.subr.bf16.mxu0 0
      %538 = vmatpush1.bf16.msra.mxu0 0
      %539 = vmatprep.subr.bf16.mxu0 0
      %540 = vmatpush1.bf16.msra.mxu0 0
      %541 = vmatprep.subr.bf16.mxu0 0
      %542 = vmatpush1.bf16.msra.mxu0 0
      %543 = vmatprep.subr.bf16.mxu0 0
      %544 = vmatpush1.bf16.msra.mxu0 0
      %545 = vmatprep.subr.bf16.mxu0 0
      %546 = vmatpush1.bf16.msra.mxu0 0
      %547 = vmatprep.subr.bf16.mxu0 0
      %548 = vmatpush1.bf16.msra.mxu0 0
      %549 = vmatprep.mubr.bf16.mxu0 0
      %550 = vmatmul.mubr.bf16.gmra.mrb[0].mxu0 %v503
      %v551 = vpop.f32.mrb[0].mxu0
      %v552 = vadd.f32 0.0, %v551
      %v553 = vpop.f32.mrb[0].mxu0
      %v554 = vpop.f32.mrb[0].mxu0
      %v555 = vadd.f32 0.0, %v554
      %v556 = vpop.f32.mrb[0].mxu0
      %557 = vmatprep.mubr.bf16.mxu0 0
      %558 = vmatmul.mubr.bf16.gmra.mrb[0].mxu0 %v506
      %v559 = vpop.f32.mrb[0].mxu0
      %v560 = vadd.f32 0.0, %v559
      %v561 = vpop.f32.mrb[0].mxu0
      %v562 = vpop.f32.mrb[0].mxu0
      %v563 = vadd.f32 0.0, %v562
      %v564 = vpop.f32.mrb[0].mxu0
      %565 = vmatprep.mubr.bf16.mxu0 0
      %566 = vmatmul.mubr.bf16.gmra.mrb[0].mxu0 %v509
      %v567 = vpop.f32.mrb[0].mxu0
      %v568 = vadd.f32 0.0, %v567
      %v569 = vpop.f32.mrb[0].mxu0
      %v570 = vpop.f32.mrb[0].mxu0
      %v571 = vadd.f32 0.0, %v570
      %v572 = vpop.f32.mrb[0].mxu0
      %573 = vmatprep.mubr.bf16.mxu0 0
      %574 = vmatmul.mubr.bf16.gmra.mrb[0].mxu0 %v512
      %v575 = vpop.f32.mrb[0].mxu0
      %v576 = vadd.f32 0.0, %v575
      %v577 = vpop.f32.mrb[0].mxu0
      %v578 = vpop.f32.mrb[0].mxu0
      %v579 = vadd.f32 0.0, %v578
      %v580 = vpop.f32.mrb[0].mxu0
      %581 = vdwg.mxu0
      %v582 = vadd.f32 %v417, %v552
      %v583 = vadd.f32 %v420, %v555
      %v584 = vadd.f32 %v425, %v560
      %v585 = vadd.f32 %v428, %v563
      %v586 = vadd.f32 %v433, %v568
      %v587 = vadd.f32 %v436, %v571
      %v588 = vadd.f32 %v441, %v576
      %v589 = vadd.f32 %v444, %v579
      %v590 = vpack.c.bf16 %v252, %v250
      %v591 = vpack.c.bf16 %v256, %v254
      %v592 = vpack.c.bf16 %v260, %v258
      %v593 = vpack.c.bf16 %v264, %v262
      %s594 = scalar_lea.vmem %s1, 6
      %v595 = vld [vmem:[%s594] sm:$0x3]
      %v597 = vsel %vm285, %v590, 0
      %v600 = vsel %vm285, %v591, 0
      %v603 = vsel %vm285, %v592, 0
      %v606 = vsel %vm285, %v593, 0
      %v609 = vsel %vm298, %v595, 0
      %611 = vmatprep.subr.bf16.mxu0 0
      %612 = vmatpush1.bf16.msra.mxu0 %v609
      %613 = vmatprep.subr.bf16.mxu0 0
      %614 = vmatpush1.bf16.msra.mxu0 0
      %615 = vmatprep.subr.bf16.mxu0 0
      %616 = vmatpush1.bf16.msra.mxu0 0
      %617 = vmatprep.subr.bf16.mxu0 0
      %618 = vmatpush1.bf16.msra.mxu0 0
      %619 = vmatprep.subr.bf16.mxu0 0
      %620 = vmatpush1.bf16.msra.mxu0 0
      %621 = vmatprep.subr.bf16.mxu0 0
      %622 = vmatpush1.bf16.msra.mxu0 0
      %623 = vmatprep.subr.bf16.mxu0 0
      %624 = vmatpush1.bf16.msra.mxu0 0
      %625 = vmatprep.subr.bf16.mxu0 0
      %626 = vmatpush1.bf16.msra.mxu0 0
      %627 = vmatprep.subr.bf16.mxu0 0
      %628 = vmatpush1.bf16.msra.mxu0 0
      %629 = vmatprep.subr.bf16.mxu0 0
      %630 = vmatpush1.bf16.msra.mxu0 0
      %631 = vmatprep.subr.bf16.mxu0 0
      %632 = vmatpush1.bf16.msra.mxu0 0
      %633 = vmatprep.subr.bf16.mxu0 0
      %634 = vmatpush1.bf16.msra.mxu0 0
      %635 = vmatprep.subr.bf16.mxu0 0
      %636 = vmatpush1.bf16.msra.mxu0 0
      %637 = vmatprep.subr.bf16.mxu0 0
      %638 = vmatpush1.bf16.msra.mxu0 0
      %639 = vmatprep.subr.bf16.mxu0 0
      %640 = vmatpush1.bf16.msra.mxu0 0
      %641 = vmatprep.subr.bf16.mxu0 0
      %642 = vmatpush1.bf16.msra.mxu0 0
      %643 = vmatprep.mubr.bf16.mxu0 0
      %644 = vmatmul.mubr.bf16.gmra.mrb[0].mxu0 %v597
      %v645 = vpop.f32.mrb[0].mxu0
      %v646 = vadd.f32 0.0, %v645
      %v647 = vpop.f32.mrb[0].mxu0
      %v648 = vpop.f32.mrb[0].mxu0
      %v649 = vadd.f32 0.0, %v648
      %v650 = vpop.f32.mrb[0].mxu0
      %651 = vmatprep.mubr.bf16.mxu0 0
      %652 = vmatmul.mubr.bf16.gmra.mrb[0].mxu0 %v600
      %v653 = vpop.f32.mrb[0].mxu0
      %v654 = vadd.f32 0.0, %v653
      %v655 = vpop.f32.mrb[0].mxu0
      %v656 = vpop.f32.mrb[0].mxu0
      %v657 = vadd.f32 0.0, %v656
      %v658 = vpop.f32.mrb[0].mxu0
      %659 = vmatprep.mubr.bf16.mxu0 0
      %660 = vmatmul.mubr.bf16.gmra.mrb[0].mxu0 %v603
      %v661 = vpop.f32.mrb[0].mxu0
      %v662 = vadd.f32 0.0, %v661
      %v663 = vpop.f32.mrb[0].mxu0
      %v664 = vpop.f32.mrb[0].mxu0
      %v665 = vadd.f32 0.0, %v664
      %v666 = vpop.f32.mrb[0].mxu0
      %667 = vmatprep.mubr.bf16.mxu0 0
      %668 = vmatmul.mubr.bf16.gmra.mrb[0].mxu0 %v606
      %v669 = vpop.f32.mrb[0].mxu0
      %v670 = vadd.f32 0.0, %v669
      %v671 = vpop.f32.mrb[0].mxu0
      %v672 = vpop.f32.mrb[0].mxu0
      %v673 = vadd.f32 0.0, %v672
      %v674 = vpop.f32.mrb[0].mxu0
      %675 = vdwg.mxu0
      %v676 = vadd.f32 %v582, %v646
      %v677 = vadd.f32 %v583, %v649
      %v678 = vadd.f32 %v584, %v654
      %v679 = vadd.f32 %v585, %v657
      %v680 = vadd.f32 %v586, %v662
      %v681 = vadd.f32 %v587, %v665
      %v682 = vadd.f32 %v588, %v670
      %v683 = vadd.f32 %v589, %v673
      %v684 = vpack.c.bf16 %v267, %v266
      %v685 = vpack.c.bf16 %v269, %v268
      %v686 = vpack.c.bf16 %v271, %v270
      %v687 = vpack.c.bf16 %v273, %v272
      %s688 = scalar_lea.vmem %s1, 8
      %v689 = vld [vmem:[%s688] sm:$0x3]
      %v691 = vsel %vm285, %v684, 0
      %v694 = vsel %vm285, %v685, 0
      %v697 = vsel %vm285, %v686, 0
      %v700 = vsel %vm285, %v687, 0
      %v703 = vsel %vm298, %v689, 0
      %705 = vmatprep.subr.bf16.mxu0 0
      %706 = vmatpush1.bf16.msra.mxu0 %v703
      %707 = vmatprep.subr.bf16.mxu0 0
      %708 = vmatpush1.bf16.msra.mxu0 0
      %709 = vmatprep.subr.bf16.mxu0 0
      %710 = vmatpush1.bf16.msra.mxu0 0
      %711 = vmatprep.subr.bf16.mxu0 0
      %712 = vmatpush1.bf16.msra.mxu0 0
      %713 = vmatprep.subr.bf16.mxu0 0
      %714 = vmatpush1.bf16.msra.mxu0 0
      %715 = vmatprep.subr.bf16.mxu0 0
      %716 = vmatpush1.bf16.msra.mxu0 0
      %717 = vmatprep.subr.bf16.mxu0 0
      %718 = vmatpush1.bf16.msra.mxu0 0
      %719 = vmatprep.subr.bf16.mxu0 0
      %720 = vmatpush1.bf16.msra.mxu0 0
      %721 = vmatprep.subr.bf16.mxu0 0
      %722 = vmatpush1.bf16.msra.mxu0 0
      %723 = vmatprep.subr.bf16.mxu0 0
      %724 = vmatpush1.bf16.msra.mxu0 0
      %725 = vmatprep.subr.bf16.mxu0 0
      %726 = vmatpush1.bf16.msra.mxu0 0
      %727 = vmatprep.subr.bf16.mxu0 0
      %728 = vmatpush1.bf16.msra.mxu0 0
      %729 = vmatprep.subr.bf16.mxu0 0
      %730 = vmatpush1.bf16.msra.mxu0 0
      %731 = vmatprep.subr.bf16.mxu0 0
      %732 = vmatpush1.bf16.msra.mxu0 0
      %733 = vmatprep.subr.bf16.mxu0 0
      %734 = vmatpush1.bf16.msra.mxu0 0
      %735 = vmatprep.subr.bf16.mxu0 0
      %736 = vmatpush1.bf16.msra.mxu0 0
      %737 = vmatprep.mubr.bf16.mxu0 0
      %738 = vmatmul.mubr.bf16.gmra.mrb[0].mxu0 %v691
      %v739 = vpop.f32.mrb[0].mxu0
      %v740 = vadd.f32 0.0, %v739
      %v741 = vpop.f32.mrb[0].mxu0
      %v742 = vpop.f32.mrb[0].mxu0
      %v743 = vadd.f32 0.0, %v742
      %v744 = vpop.f32.mrb[0].mxu0
      %745 = vmatprep.mubr.bf16.mxu0 0
      %746 = vmatmul.mubr.bf16.gmra.mrb[0].mxu0 %v694
      %v747 = vpop.f32.mrb[0].mxu0
      %v748 = vadd.f32 0.0, %v747
      %v749 = vpop.f32.mrb[0].mxu0
      %v750 = vpop.f32.mrb[0].mxu0
      %v751 = vadd.f32 0.0, %v750
      %v752 = vpop.f32.mrb[0].mxu0
      %753 = vmatprep.mubr.bf16.mxu0 0
      %754 = vmatmul.mubr.bf16.gmra.mrb[0].mxu0 %v697
      %v755 = vpop.f32.mrb[0].mxu0
      %v756 = vadd.f32 0.0, %v755
      %v757 = vpop.f32.mrb[0].mxu0
      %v758 = vpop.f32.mrb[0].mxu0
      %v759 = vadd.f32 0.0, %v758
      %v760 = vpop.f32.mrb[0].mxu0
      %761 = vmatprep.mubr.bf16.mxu0 0
      %762 = vmatmul.mubr.bf16.gmra.mrb[0].mxu0 %v700
      %v763 = vpop.f32.mrb[0].mxu0
      %v764 = vadd.f32 0.0, %v763
      %v765 = vpop.f32.mrb[0].mxu0
      %v766 = vpop.f32.mrb[0].mxu0
      %v767 = vadd.f32 0.0, %v766
      %v768 = vpop.f32.mrb[0].mxu0
      %769 = vdwg.mxu0
      %v770 = vadd.f32 %v676, %v740
      %v771 = vadd.f32 %v677, %v743
      %v772 = vadd.f32 %v678, %v748
      %v773 = vadd.f32 %v679, %v751
      %v774 = vadd.f32 %v680, %v756
      %v775 = vadd.f32 %v681, %v759
      %v776 = vadd.f32 %v682, %v764
      %v777 = vadd.f32 %v683, %v767
      %v794 = vrot.slane %v250, 1
      %v795 = vrot.slane %v251, 1
      %v796 = vsel %vm463, %v794, %v795
      %v797 = vrot.slane %v252, 1
      %v798 = vrot.slane %v253, 1
      %v799 = vsel %vm463, %v797, %v798
      %v800 = vrot.slane %v254, 1
      %v801 = vrot.slane %v255, 1
      %v802 = vsel %vm463, %v800, %v801
      %v803 = vrot.slane %v256, 1
      %v804 = vrot.slane %v257, 1
      %v805 = vsel %vm463, %v803, %v804
      %v806 = vrot.slane %v258, 1
      %v807 = vrot.slane %v259, 1
      %v808 = vsel %vm463, %v806, %v807
      %v809 = vrot.slane %v260, 1
      %v810 = vrot.slane %v261, 1
      %v811 = vsel %vm463, %v809, %v810
      %v812 = vrot.slane %v262, 1
      %v813 = vrot.slane %v263, 1
      %v814 = vsel %vm463, %v812, %v813
      %v815 = vrot.slane %v264, 1
      %v816 = vrot.slane %v265, 1
      %v817 = vsel %vm463, %v815, %v816
      %v826 = vpack.c.bf16 %v799, %v796
      %v827 = vpack.c.bf16 %v805, %v802
      %v828 = vpack.c.bf16 %v811, %v808
      %v829 = vpack.c.bf16 %v817, %v814
      %s830 = scalar_lea.vmem %s1, 10
      %v831 = vld [vmem:[%s830] sm:$0x3]
      %v833 = vsel %vm285, %v826, 0
      %v836 = vsel %vm285, %v827, 0
      %v839 = vsel %vm285, %v828, 0
      %v842 = vsel %vm285, %v829, 0
      %v845 = vsel %vm298, %v831, 0
      %847 = vmatprep.subr.bf16.mxu0 0
      %848 = vmatpush1.bf16.msra.mxu0 %v845
      %849 = vmatprep.subr.bf16.mxu0 0
      %850 = vmatpush1.bf16.msra.mxu0 0
      %851 = vmatprep.subr.bf16.mxu0 0
      %852 = vmatpush1.bf16.msra.mxu0 0
      %853 = vmatprep.subr.bf16.mxu0 0
      %854 = vmatpush1.bf16.msra.mxu0 0
      %855 = vmatprep.subr.bf16.mxu0 0
      %856 = vmatpush1.bf16.msra.mxu0 0
      %857 = vmatprep.subr.bf16.mxu0 0
      %858 = vmatpush1.bf16.msra.mxu0 0
      %859 = vmatprep.subr.bf16.mxu0 0
      %860 = vmatpush1.bf16.msra.mxu0 0
      %861 = vmatprep.subr.bf16.mxu0 0
      %862 = vmatpush1.bf16.msra.mxu0 0
      %863 = vmatprep.subr.bf16.mxu0 0
      %864 = vmatpush1.bf16.msra.mxu0 0
      %865 = vmatprep.subr.bf16.mxu0 0
      %866 = vmatpush1.bf16.msra.mxu0 0
      %867 = vmatprep.subr.bf16.mxu0 0
      %868 = vmatpush1.bf16.msra.mxu0 0
      %869 = vmatprep.subr.bf16.mxu0 0
      %870 = vmatpush1.bf16.msra.mxu0 0
      %871 = vmatprep.subr.bf16.mxu0 0
      %872 = vmatpush1.bf16.msra.mxu0 0
      %873 = vmatprep.subr.bf16.mxu0 0
      %874 = vmatpush1.bf16.msra.mxu0 0
      %875 = vmatprep.subr.bf16.mxu0 0
      %876 = vmatpush1.bf16.msra.mxu0 0
      %877 = vmatprep.subr.bf16.mxu0 0
      %878 = vmatpush1.bf16.msra.mxu0 0
      %879 = vmatprep.mubr.bf16.mxu0 0
      %880 = vmatmul.mubr.bf16.gmra.mrb[0].mxu0 %v833
      %v881 = vpop.f32.mrb[0].mxu0
      %v882 = vadd.f32 0.0, %v881
      %v883 = vpop.f32.mrb[0].mxu0
      %v884 = vpop.f32.mrb[0].mxu0
      %v885 = vadd.f32 0.0, %v884
      %v886 = vpop.f32.mrb[0].mxu0
      %887 = vmatprep.mubr.bf16.mxu0 0
      %888 = vmatmul.mubr.bf16.gmra.mrb[0].mxu0 %v836
      %v889 = vpop.f32.mrb[0].mxu0
      %v890 = vadd.f32 0.0, %v889
      %v891 = vpop.f32.mrb[0].mxu0
      %v892 = vpop.f32.mrb[0].mxu0
      %v893 = vadd.f32 0.0, %v892
      %v894 = vpop.f32.mrb[0].mxu0
      %895 = vmatprep.mubr.bf16.mxu0 0
      %896 = vmatmul.mubr.bf16.gmra.mrb[0].mxu0 %v839
      %v897 = vpop.f32.mrb[0].mxu0
      %v898 = vadd.f32 0.0, %v897
      %v899 = vpop.f32.mrb[0].mxu0
      %v900 = vpop.f32.mrb[0].mxu0
      %v901 = vadd.f32 0.0, %v900
      %v902 = vpop.f32.mrb[0].mxu0
      %903 = vmatprep.mubr.bf16.mxu0 0
      %904 = vmatmul.mubr.bf16.gmra.mrb[0].mxu0 %v842
      %v905 = vpop.f32.mrb[0].mxu0
      %v906 = vadd.f32 0.0, %v905
      %v907 = vpop.f32.mrb[0].mxu0
      %v908 = vpop.f32.mrb[0].mxu0
      %v909 = vadd.f32 0.0, %v908
      %v910 = vpop.f32.mrb[0].mxu0
      %911 = vdwg.mxu0
      %v912 = vadd.f32 %v770, %v882
      %v913 = vadd.f32 %v771, %v885
      %v914 = vadd.f32 %v772, %v890
      %v915 = vadd.f32 %v773, %v893
      %v916 = vadd.f32 %v774, %v898
      %v917 = vadd.f32 %v775, %v901
      %v918 = vadd.f32 %v776, %v906
      %v919 = vadd.f32 %v777, %v909
      %v920 = vpack.c.bf16 %v227, %v225
      %v921 = vpack.c.bf16 %v231, %v229
      %v922 = vpack.c.bf16 %v235, %v233
      %v923 = vpack.c.bf16 %v239, %v237
      %s924 = scalar_lea.vmem %s1, 12
      %v925 = vld [vmem:[%s924] sm:$0x3]
      %v927 = vsel %vm285, %v920, 0
      %v930 = vsel %vm285, %v921, 0
      %v933 = vsel %vm285, %v922, 0
      %v936 = vsel %vm285, %v923, 0
      %v939 = vsel %vm298, %v925, 0
      %941 = vmatprep.subr.bf16.mxu0 0
      %942 = vmatpush1.bf16.msra.mxu0 %v939
      %943 = vmatprep.subr.bf16.mxu0 0
      %944 = vmatpush1.bf16.msra.mxu0 0
      %945 = vmatprep.subr.bf16.mxu0 0
      %946 = vmatpush1.bf16.msra.mxu0 0
      %947 = vmatprep.subr.bf16.mxu0 0
      %948 = vmatpush1.bf16.msra.mxu0 0
      %949 = vmatprep.subr.bf16.mxu0 0
      %950 = vmatpush1.bf16.msra.mxu0 0
      %951 = vmatprep.subr.bf16.mxu0 0
      %952 = vmatpush1.bf16.msra.mxu0 0
      %953 = vmatprep.subr.bf16.mxu0 0
      %954 = vmatpush1.bf16.msra.mxu0 0
      %955 = vmatprep.subr.bf16.mxu0 0
      %956 = vmatpush1.bf16.msra.mxu0 0
      %957 = vmatprep.subr.bf16.mxu0 0
      %958 = vmatpush1.bf16.msra.mxu0 0
      %959 = vmatprep.subr.bf16.mxu0 0
      %960 = vmatpush1.bf16.msra.mxu0 0
      %961 = vmatprep.subr.bf16.mxu0 0
      %962 = vmatpush1.bf16.msra.mxu0 0
      %963 = vmatprep.subr.bf16.mxu0 0
      %964 = vmatpush1.bf16.msra.mxu0 0
      %965 = vmatprep.subr.bf16.mxu0 0
      %966 = vmatpush1.bf16.msra.mxu0 0
      %967 = vmatprep.subr.bf16.mxu0 0
      %968 = vmatpush1.bf16.msra.mxu0 0
      %969 = vmatprep.subr.bf16.mxu0 0
      %970 = vmatpush1.bf16.msra.mxu0 0
      %971 = vmatprep.subr.bf16.mxu0 0
      %972 = vmatpush1.bf16.msra.mxu0 0
      %973 = vmatprep.mubr.bf16.mxu0 0
      %974 = vmatmul.mubr.bf16.gmra.mrb[0].mxu0 %v927
      %v975 = vpop.f32.mrb[0].mxu0
      %v976 = vadd.f32 0.0, %v975
      %v977 = vpop.f32.mrb[0].mxu0
      %v978 = vpop.f32.mrb[0].mxu0
      %v979 = vadd.f32 0.0, %v978
      %v980 = vpop.f32.mrb[0].mxu0
      %981 = vmatprep.mubr.bf16.mxu0 0
      %982 = vmatmul.mubr.bf16.gmra.mrb[0].mxu0 %v930
      %v983 = vpop.f32.mrb[0].mxu0
      %v984 = vadd.f32 0.0, %v983
      %v985 = vpop.f32.mrb[0].mxu0
      %v986 = vpop.f32.mrb[0].mxu0
      %v987 = vadd.f32 0.0, %v986
      %v988 = vpop.f32.mrb[0].mxu0
      %989 = vmatprep.mubr.bf16.mxu0 0
      %990 = vmatmul.mubr.bf16.gmra.mrb[0].mxu0 %v933
      %v991 = vpop.f32.mrb[0].mxu0
      %v992 = vadd.f32 0.0, %v991
      %v993 = vpop.f32.mrb[0].mxu0
      %v994 = vpop.f32.mrb[0].mxu0
      %v995 = vadd.f32 0.0, %v994
      %v996 = vpop.f32.mrb[0].mxu0
      %997 = vmatprep.mubr.bf16.mxu0 0
      %998 = vmatmul.mubr.bf16.gmra.mrb[0].mxu0 %v936
      %v999 = vpop.f32.mrb[0].mxu0
      %v1000 = vadd.f32 0.0, %v999
      %v1001 = vpop.f32.mrb[0].mxu0
      %v1002 = vpop.f32.mrb[0].mxu0
      %v1003 = vadd.f32 0.0, %v1002
      %v1004 = vpop.f32.mrb[0].mxu0
      %1005 = vdwg.mxu0
      %v1006 = vadd.f32 %v912, %v976
      %v1007 = vadd.f32 %v913, %v979
      %v1008 = vadd.f32 %v914, %v984
      %v1009 = vadd.f32 %v915, %v987
      %v1010 = vadd.f32 %v916, %v992
      %v1011 = vadd.f32 %v917, %v995
      %v1012 = vadd.f32 %v918, %v1000
      %v1013 = vadd.f32 %v919, %v1003
      %v1014 = vpack.c.bf16 %v243, %v242
      %v1015 = vpack.c.bf16 %v245, %v244
      %v1016 = vpack.c.bf16 %v247, %v246
      %v1017 = vpack.c.bf16 %v249, %v248
      %s1018 = scalar_lea.vmem %s1, 14
      %v1019 = vld [vmem:[%s1018] sm:$0x3]
      %v1021 = vsel %vm285, %v1014, 0
      %v1024 = vsel %vm285, %v1015, 0
      %v1027 = vsel %vm285, %v1016, 0
      %v1030 = vsel %vm285, %v1017, 0
      %v1033 = vsel %vm298, %v1019, 0
      %1035 = vmatprep.subr.bf16.mxu0 0
      %1036 = vmatpush1.bf16.msra.mxu0 %v1033
      %1037 = vmatprep.subr.bf16.mxu0 0
      %1038 = vmatpush1.bf16.msra.mxu0 0
      %1039 = vmatprep.subr.bf16.mxu0 0
      %1040 = vmatpush1.bf16.msra.mxu0 0
      %1041 = vmatprep.subr.bf16.mxu0 0
      %1042 = vmatpush1.bf16.msra.mxu0 0
      %1043 = vmatprep.subr.bf16.mxu0 0
      %1044 = vmatpush1.bf16.msra.mxu0 0
      %1045 = vmatprep.subr.bf16.mxu0 0
      %1046 = vmatpush1.bf16.msra.mxu0 0
      %1047 = vmatprep.subr.bf16.mxu0 0
      %1048 = vmatpush1.bf16.msra.mxu0 0
      %1049 = vmatprep.subr.bf16.mxu0 0
      %1050 = vmatpush1.bf16.msra.mxu0 0
      %1051 = vmatprep.subr.bf16.mxu0 0
      %1052 = vmatpush1.bf16.msra.mxu0 0
      %1053 = vmatprep.subr.bf16.mxu0 0
      %1054 = vmatpush1.bf16.msra.mxu0 0
      %1055 = vmatprep.subr.bf16.mxu0 0
      %1056 = vmatpush1.bf16.msra.mxu0 0
      %1057 = vmatprep.subr.bf16.mxu0 0
      %1058 = vmatpush1.bf16.msra.mxu0 0
      %1059 = vmatprep.subr.bf16.mxu0 0
      %1060 = vmatpush1.bf16.msra.mxu0 0
      %1061 = vmatprep.subr.bf16.mxu0 0
      %1062 = vmatpush1.bf16.msra.mxu0 0
      %1063 = vmatprep.subr.bf16.mxu0 0
      %1064 = vmatpush1.bf16.msra.mxu0 0
      %1065 = vmatprep.subr.bf16.mxu0 0
      %1066 = vmatpush1.bf16.msra.mxu0 0
      %1067 = vmatprep.mubr.bf16.mxu0 0
      %1068 = vmatmul.mubr.bf16.gmra.mrb[0].mxu0 %v1021
      %v1069 = vpop.f32.mrb[0].mxu0
      %v1070 = vadd.f32 0.0, %v1069
      %v1071 = vpop.f32.mrb[0].mxu0
      %v1072 = vpop.f32.mrb[0].mxu0
      %v1073 = vadd.f32 0.0, %v1072
      %v1074 = vpop.f32.mrb[0].mxu0
      %1075 = vmatprep.mubr.bf16.mxu0 0
      %1076 = vmatmul.mubr.bf16.gmra.mrb[0].mxu0 %v1024
      %v1077 = vpop.f32.mrb[0].mxu0
      %v1078 = vadd.f32 0.0, %v1077
      %v1079 = vpop.f32.mrb[0].mxu0
      %v1080 = vpop.f32.mrb[0].mxu0
      %v1081 = vadd.f32 0.0, %v1080
      %v1082 = vpop.f32.mrb[0].mxu0
      %1083 = vmatprep.mubr.bf16.mxu0 0
      %1084 = vmatmul.mubr.bf16.gmra.mrb[0].mxu0 %v1027
      %v1085 = vpop.f32.mrb[0].mxu0
      %v1086 = vadd.f32 0.0, %v1085
      %v1087 = vpop.f32.mrb[0].mxu0
      %v1088 = vpop.f32.mrb[0].mxu0
      %v1089 = vadd.f32 0.0, %v1088
      %v1090 = vpop.f32.mrb[0].mxu0
      %1091 = vmatprep.mubr.bf16.mxu0 0
      %1092 = vmatmul.mubr.bf16.gmra.mrb[0].mxu0 %v1030
      %v1093 = vpop.f32.mrb[0].mxu0
      %v1094 = vadd.f32 0.0, %v1093
      %v1095 = vpop.f32.mrb[0].mxu0
      %v1096 = vpop.f32.mrb[0].mxu0
      %v1097 = vadd.f32 0.0, %v1096
      %v1098 = vpop.f32.mrb[0].mxu0
      %1099 = vdwg.mxu0
      %v1100 = vadd.f32 %v1006, %v1070
      %v1101 = vadd.f32 %v1007, %v1073
      %v1102 = vadd.f32 %v1008, %v1078
      %v1103 = vadd.f32 %v1009, %v1081
      %v1104 = vadd.f32 %v1010, %v1086
      %v1105 = vadd.f32 %v1011, %v1089
      %v1106 = vadd.f32 %v1012, %v1094
      %v1107 = vadd.f32 %v1013, %v1097
      %v1110 = vrot.slane %v239, 1
      %v1111 = vrot.slane %v240, 1
      %v1112 = vsel %vm463, %v1110, %v1111
      %v1114 = vpack.c.bf16 %v472, %v469
      %v1115 = vpack.c.bf16 %v478, %v475
      %v1116 = vpack.c.bf16 %v484, %v481
      %v1117 = vpack.c.bf16 %v1112, %v487
      %s1118 = scalar_lea.vmem %s1, 16
      %v1119 = vld [vmem:[%s1118] sm:$0x3]
      %v1121 = vsel %vm285, %v1114, 0
      %v1124 = vsel %vm285, %v1115, 0
      %v1127 = vsel %vm285, %v1116, 0
      %v1130 = vsel %vm285, %v1117, 0
      %v1133 = vsel %vm298, %v1119, 0
      %1135 = vmatprep.subr.bf16.mxu0 0
      %1136 = vmatpush1.bf16.msra.mxu0 %v1133
      %1137 = vmatprep.subr.bf16.mxu0 0
      %1138 = vmatpush1.bf16.msra.mxu0 0
      %1139 = vmatprep.subr.bf16.mxu0 0
      %1140 = vmatpush1.bf16.msra.mxu0 0
      %1141 = vmatprep.subr.bf16.mxu0 0
      %1142 = vmatpush1.bf16.msra.mxu0 0
      %1143 = vmatprep.subr.bf16.mxu0 0
      %1144 = vmatpush1.bf16.msra.mxu0 0
      %1145 = vmatprep.subr.bf16.mxu0 0
      %1146 = vmatpush1.bf16.msra.mxu0 0
      %1147 = vmatprep.subr.bf16.mxu0 0
      %1148 = vmatpush1.bf16.msra.mxu0 0
      %1149 = vmatprep.subr.bf16.mxu0 0
      %1150 = vmatpush1.bf16.msra.mxu0 0
      %1151 = vmatprep.subr.bf16.mxu0 0
      %1152 = vmatpush1.bf16.msra.mxu0 0
      %1153 = vmatprep.subr.bf16.mxu0 0
      %1154 = vmatpush1.bf16.msra.mxu0 0
      %1155 = vmatprep.subr.bf16.mxu0 0
      %1156 = vmatpush1.bf16.msra.mxu0 0
      %1157 = vmatprep.subr.bf16.mxu0 0
      %1158 = vmatpush1.bf16.msra.mxu0 0
      %1159 = vmatprep.subr.bf16.mxu0 0
      %1160 = vmatpush1.bf16.msra.mxu0 0
      %1161 = vmatprep.subr.bf16.mxu0 0
      %1162 = vmatpush1.bf16.msra.mxu0 0
      %1163 = vmatprep.subr.bf16.mxu0 0
      %1164 = vmatpush1.bf16.msra.mxu0 0
      %1165 = vmatprep.subr.bf16.mxu0 0
      %1166 = vmatpush1.bf16.msra.mxu0 0
      %1167 = vmatprep.mubr.bf16.mxu0 0
      %1168 = vmatmul.mubr.bf16.gmra.mrb[0].mxu0 %v1121
      %v1169 = vpop.f32.mrb[0].mxu0
      %v1170 = vadd.f32 0.0, %v1169
      %v1171 = vpop.f32.mrb[0].mxu0
      %v1172 = vpop.f32.mrb[0].mxu0
      %v1173 = vadd.f32 0.0, %v1172
      %v1174 = vpop.f32.mrb[0].mxu0
      %1175 = vmatprep.mubr.bf16.mxu0 0
      %1176 = vmatmul.mubr.bf16.gmra.mrb[0].mxu0 %v1124
      %v1177 = vpop.f32.mrb[0].mxu0
      %v1178 = vadd.f32 0.0, %v1177
      %v1179 = vpop.f32.mrb[0].mxu0
      %v1180 = vpop.f32.mrb[0].mxu0
      %v1181 = vadd.f32 0.0, %v1180
      %v1182 = vpop.f32.mrb[0].mxu0
      %1183 = vmatprep.mubr.bf16.mxu0 0
      %1184 = vmatmul.mubr.bf16.gmra.mrb[0].mxu0 %v1127
      %v1185 = vpop.f32.mrb[0].mxu0
      %v1186 = vadd.f32 0.0, %v1185
      %v1187 = vpop.f32.mrb[0].mxu0
      %v1188 = vpop.f32.mrb[0].mxu0
      %v1189 = vadd.f32 0.0, %v1188
      %v1190 = vpop.f32.mrb[0].mxu0
      %1191 = vmatprep.mubr.bf16.mxu0 0
      %1192 = vmatmul.mubr.bf16.gmra.mrb[0].mxu0 %v1130
      %v1193 = vpop.f32.mrb[0].mxu0
      %v1194 = vadd.f32 0.0, %v1193
      %v1195 = vpop.f32.mrb[0].mxu0
      %v1196 = vpop.f32.mrb[0].mxu0
      %v1197 = vadd.f32 0.0, %v1196
      %v1198 = vpop.f32.mrb[0].mxu0
      %1199 = vdwg.mxu0
      %v1200 = vadd.f32 %v1100, %v1170
      %v1201 = vadd.f32 %v1101, %v1173
      %v1202 = vadd.f32 %v1102, %v1178
      %v1203 = vadd.f32 %v1103, %v1181
      %v1204 = vadd.f32 %v1104, %v1186
      %v1205 = vadd.f32 %v1105, %v1189
      %v1206 = vadd.f32 %v1106, %v1194
      %v1207 = vadd.f32 %v1107, %v1197
      %v1208 = vld [vmem:[%s2] sm:$0x1]
      %v1210 = vlaneseq
      %v1211 = vshrl.u32 %v1210, 7
      %v1212 = vsub.s32 0, %v1211
      %v1213 = vrot.slane %v1208, %v1212
      %v1215 = vadd.f32 %v1200, %v1213
      %v1216 = vadd.f32 %v1201, %v1213
      %v1217 = vadd.f32 %v1202, %v1213
      %v1218 = vadd.f32 %v1203, %v1213
      %v1219 = vadd.f32 %v1204, %v1213
      %v1220 = vadd.f32 %v1205, %v1213
      %v1221 = vadd.f32 %v1206, %v1213
      %v1222 = vadd.f32 %v1207, %v1213
      %v1223 = vmax.f32 %v1215, 0.0
      %v1224 = vmax.f32 %v1216, 0.0
      %v1225 = vmax.f32 %v1217, 0.0
      %v1226 = vmax.f32 %v1218, 0.0
      %v1227 = vmax.f32 %v1219, 0.0
      %v1228 = vmax.f32 %v1220, 0.0
      %v1229 = vmax.f32 %v1221, 0.0
      %v1230 = vmax.f32 %v1222, 0.0
      %1231 = vst [vmem:[%s170] sm:$0xff] %v1223
      %1232 = vst [vmem:[%s170 + $0x8] sm:$0xff] %v1224
      %1233 = vst [vmem:[%s170 + $0x10] sm:$0xff] %v1225
      %1234 = vst [vmem:[%s170 + $0x18] sm:$0xff] %v1226
      %1235 = vst [vmem:[%s170 + $0x20] sm:$0xff] %v1227
      %1236 = vst [vmem:[%s170 + $0x28] sm:$0xff] %v1228
      %1237 = vst [vmem:[%s170 + $0x30] sm:$0xff] %v1229
      %1238 = vst [vmem:[%s170 + $0x38] sm:$0xff] %v1230
      %p1239 = scmp.lt.s32.totalorder %s14, 1
      %s1240 = scalar_select %p1239, %s14, 1
      %s1241 = smul.addr %s1240, 8
      %s1242 = smul.addr %s1241, 8
      %s1243 = scalar_lea.vmem %s3, %s1242
      // Predicated region
      $region33: #{res_down_block.2} parent=31 // pred_check
        %p1244 = pneg %p100
      $region34: #{res_down_block.2} parent=31 // pred_check_branch
        %1246 = sbr.rel (%p1244) target = $region36
      $region35: #{res_down_block.2} parent=31 // pred_region
        _
      $region36: #{res_down_block.2} parent=31 // pred_fallthru
        _
    $region32: #{res_down_block.2} parent=5 // pred_fallthru
      _
    %p1247 = scmp.le.s32.totalorder 2, %s9
    // Predicated region
    $region37: #{res_down_block.2} parent=5 // pred_check
      %p1248 = pneg %p1247
    $region38: #{res_down_block.2} parent=5 // pred_check_branch
      %1250 = sbr.rel (%p1248) target = $region40
    $region39: #{res_down_block.2} parent=5 // pred_region
      %s1251 = ssub.s32 %s9, 2
      // Predicated region
      $region41: #{res_down_block.2} parent=39 // pred_check
        %p1252 = pneg %p106
      $region42: #{res_down_block.2} parent=39 // pred_check_branch
        %1254 = sbr.rel (%p1252) target = $region44
      $region43: #{res_down_block.2} parent=39 // pred_region
        %p1255 = scmp.lt.s32.totalorder %s15, 1
        %s1256 = scalar_select %p1255, %s15, 1
        %s1257 = smul.addr %s1256, 8
        %s1258 = smul.addr %s1257, 8
        %s1259 = scalar_lea.vmem %s3, %s1258
      $region44: #{res_down_block.2} parent=39 // pred_fallthru
        _
    $region40: #{res_down_block.2} parent=5 // pred_fallthru
      _
  $region6: #{res_down_block.2} parent=0 // loop_footer
    %s13 = sadd.s32 1, %s9
  $region7: #{res_down_block.2} parent=0 // loop_footer_branch
    %8 = sbr.rel target = $region3
  $region8: #{res_down_block.2} parent=0 // loop_exit
    _

// kernel: res_down_block.3
$region0: #{res_down_block.3}
  #allocation0 [shape = 'u32[]', space=smem, size = 0x4, offset = 0x4, fixed_abs, tag = 'smem constant byte address 0x4 - core index']
  #allocation1 [shape = 'u32[144,128]{1,0:T(1,128)}', space=vmem, size = 0x12000, scoped, tag = 'internal scratch']
  %s0 = inlined_call_operand.vmem [shape: bf16[2,10,10,128], index: 0, kind: input, shape index: {}]
  %s1 = inlined_call_operand.vmem [shape: bf16[9,128,128], index: 1, kind: input, shape index: {}]
  %s2 = inlined_call_operand.vmem [shape: f32[1,128], index: 2, kind: input, shape index: {}]
  %s3 = inlined_call_operand.vmem [shape: f32[2,64,128], index: 3, kind: input, shape index: {}]
  %s4 = inlined_call_operand.vmem [shape: f32[2,64,128], index: 4, kind: output, shape index: {}]
  %s5 = sld [smem:[#allocation0]]
  $region49: #{res_down_block.3} parent=0
    _
  %s7 = ssub.s32 1, %s5
  %s8 = scalar_select 0, %s7, %s5
  loop: start=0, step=1, limit=4
  $region2: #{res_down_block.3} parent=0 // loop_pre_header
    _
  $region3: #{res_down_block.3} parent=0 // loop_header
    %s10 = sphi 0, %s14
    %p11 = scmp.ge.s32.totalorder %s10, 4
    %s20 = sphi 0, %s22
    %s23 = sphi 0, %s20
    %s24 = sphi 0, %s23
    %s40 = sphi 0, %s24
    %s44 = sphi 0, %s44
    %s46 = sphi 0, %s44
    %s47 = sphi 0, %s46
    %s61 = sphi 0, %s47
    %s65 = sphi 0, %s65
    %s67 = sphi 0, %s65
    %s68 = sphi 0, %s67
    %s82 = sphi 0, %s68
    %s88 = sphi 0, %s90
    %s91 = sphi 0, %s88
    %s92 = sphi 0, %s91
    %s108 = sphi 0, %s92
    %s114 = sphi 0, %s116
    %s117 = sphi 0, %s114
    %s118 = sphi 0, %s117
    %s134 = sphi 0, %s118
  $region4: #{res_down_block.3} parent=0 // loop_header_branch
    %13 = sbr.rel (%p11) target = $region8
  $region5: #{res_down_block.3} parent=0 // loop_body
    %s15 = ssub.s32 %s10, 1
    %s16 = ssub.s32 %s10, 2
    %s17 = sadd.s32 %s10, 1
    %s18 = ssub.s32 %s10, %s17
    %p19 = scmp.eq.s32.totalorder %s18, 0
    %s21 = sadd.s32 %s20, 1
    %s22 = scalar_select %p19, %s20, %s21
    %p25 = pneg %p19
    %p26 = scmp.eq.s32.totalorder %s10, 1
    %p27 = por %p25, %p26
    %p28 = scmp.ne.s32.totalorder %s20, %s23
    %p29 = scmp.eq.s32.totalorder %s10, 0
    %p30 = por %p28, %p29
    %p31 = scmp.ne.s32.totalorder %s20, %s23
    %p32 = scmp.eq.s32.totalorder %s15, 1
    %p33 = por %p31, %p32
    %p34 = scmp.ne.s32.totalorder %s23, %s24
    %p35 = scmp.eq.s32.totalorder %s15, 0
    %p36 = por %p34, %p35
    %p37 = scmp.ne.s32.totalorder %s23, %s24
    %p38 = scmp.eq.s32.totalorder %s16, 1
    %p39 = por %p37, %p38
    %p41 = scmp.ne.s32.totalorder %s24, %s40
    %p42 = scmp.eq.s32.totalorder %s16, 0
    %p43 = por %p41, %p42
    %s45 = sadd.s32 %s44, 1
    %p48 = scmp.eq.s32.totalorder %s10, 1
    %p49 = scmp.ne.s32.totalorder %s44, %s46
    %p50 = scmp.eq.s32.totalorder %s10, 0
    %p51 = por %p49, %p50
    %p52 = scmp.ne.s32.totalorder %s44, %s46
    %p53 = scmp.eq.s32.totalorder %s15, 1
    %p54 = por %p52, %p53
    %p55 = scmp.ne.s32.totalorder %s46, %s47
    %p56 = scmp.eq.s32.totalorder %s15, 0
    %p57 = por %p55, %p56
    %p58 = scmp.ne.s32.totalorder %s46, %s47
    %p59 = scmp.eq.s32.totalorder %s16, 1
    %p60 = por %p58, %p59
    %p62 = scmp.ne.s32.totalorder %s47, %s61
    %p63 = scmp.eq.s32.totalorder %s16, 0
    %p64 = por %p62, %p63
    %s66 = sadd.s32 %s65, 1
    %p69 = scmp.eq.s32.totalorder %s10, 1
    %p70 = scmp.ne.s32.totalorder %s65, %s67
    %p71 = scmp.eq.s32.totalorder %s10, 0
    %p72 = por %p70, %p71
    %p73 = scmp.ne.s32.totalorder %s65, %s67
    %p74 = scmp.eq.s32.totalorder %s15, 1
    %p75 = por %p73, %p74
    %p76 = scmp.ne.s32.totalorder %s67, %s68
    %p77 = scmp.eq.s32.totalorder %s15, 0
    %p78 = por %p76, %p77
    %p79 = scmp.ne.s32.totalorder %s67, %s68
    %p80 = scmp.eq.s32.totalorder %s16, 1
    %p81 = por %p79, %p80
    %p83 = scmp.ne.s32.totalorder %s68, %s82
    %p84 = scmp.eq.s32.totalorder %s16, 0
    %p85 = por %p83, %p84
    %s86 = ssub.s32 %s10, %s17
    %p87 = scmp.eq.s32.totalorder %s86, 0
    %s89 = sadd.s32 %s88, 1
    %s90 = scalar_select %p87, %s88, %s89
    %p93 = pneg %p87
    %p94 = scmp.eq.s32.totalorder %s10, 1
    %p95 = por %p93, %p94
    %p96 = scmp.ne.s32.totalorder %s88, %s91
    %p97 = scmp.eq.s32.totalorder %s10, 0
    %p98 = por %p96, %p97
    %p99 = scmp.ne.s32.totalorder %s88, %s91
    %p100 = scmp.eq.s32.totalorder %s15, 1
    %p101 = por %p99, %p100
    %p102 = scmp.ne.s32.totalorder %s91, %s92
    %p103 = scmp.eq.s32.totalorder %s15, 0
    %p104 = por %p102, %p103
    %p105 = scmp.ne.s32.totalorder %s91, %s92
    %p106 = scmp.eq.s32.totalorder %s16, 1
    %p107 = por %p105, %p106
    %p109 = scmp.ne.s32.totalorder %s92, %s108
    %p110 = scmp.eq.s32.totalorder %s16, 0
    %p111 = por %p109, %p110
    %s112 = ssub.s32 %s10, %s17
    %p113 = scmp.eq.s32.totalorder %s112, 0
    %s115 = sadd.s32 %s114, 1
    %s116 = scalar_select %p113, %s114, %s115
    %p119 = pneg %p113
    %p120 = scmp.eq.s32.totalorder %s10, 1
    %p121 = por %p119, %p120
    %p122 = scmp.ne.s32.totalorder %s114, %s117
    %p123 = scmp.eq.s32.totalorder %s10, 0
    %p124 = por %p122, %p123
    %p125 = scmp.ne.s32.totalorder %s114, %s117
    %p126 = scmp.eq.s32.totalorder %s15, 1
    %p127 = por %p125, %p126
    %p128 = scmp.ne.s32.totalorder %s117, %s118
    %p129 = scmp.eq.s32.totalorder %s15, 0
    %p130 = por %p128, %p129
    %p131 = scmp.ne.s32.totalorder %s117, %s118
    %p132 = scmp.eq.s32.totalorder %s16, 1
    %p133 = por %p131, %p132
    %p135 = scmp.ne.s32.totalorder %s118, %s134
    %p136 = scmp.eq.s32.totalorder %s16, 0
    %p137 = por %p135, %p136
    %p138 = scmp.le.s32.totalorder 1, %s10
    %p139 = scmp.lt.s32.totalorder %s10, 3
    %p140 = pnand %p138, %p139
    %p141 = pneg %p140
    // Predicated region
    $region9: #{res_down_block.3} parent=5 // pred_check
      _
    $region10: #{res_down_block.3} parent=5 // pred_check_branch
      %143 = sbr.rel (%p140) target = $region12
    $region11: #{res_down_block.3} parent=5 // pred_region
      %s144 = ssub.s32 %s10, 1
      // Predicated region
      $region13: #{res_down_block.3} parent=11 // pred_check
        %p145 = pneg %p57
      $region14: #{res_down_block.3} parent=11 // pred_check_branch
        %147 = sbr.rel (%p145) target = $region16
      $region15: #{res_down_block.3} parent=11 // pred_region
        _
      $region16: #{res_down_block.3} parent=11 // pred_fallthru
        _
      // Predicated region
      $region17: #{res_down_block.3} parent=11 // pred_check
        %p148 = pneg %p78
      $region18: #{res_down_block.3} parent=11 // pred_check_branch
        %150 = sbr.rel (%p148) target = $region20
      $region19: #{res_down_block.3} parent=11 // pred_region
        _
      $region20: #{res_down_block.3} parent=11 // pred_fallthru
        _
    $region12: #{res_down_block.3} parent=5 // pred_fallthru
      _
    %p151 = scmp.lt.s32.totalorder %s10, 2
    // Predicated region
    $region21: #{res_down_block.3} parent=5 // pred_check
      %p152 = pneg %p151
    $region22: #{res_down_block.3} parent=5 // pred_check_branch
      %154 = sbr.rel (%p152) target = $region24
    $region23: #{res_down_block.3} parent=5 // pred_region
      // Predicated region
      $region25: #{res_down_block.3} parent=23 // pred_check
        %p155 = pneg %p30
      $region26: #{res_down_block.3} parent=23 // pred_check_branch
        %157 = sbr.rel (%p155) target = $region28
      $region27: #{res_down_block.3} parent=23 // pred_region
        %p158 = scmp.lt.s32.totalorder %s10, 1
        %s159 = scalar_select %p158, %s10, 1
        %s160 = smul.addr %s159, 20
        %s161 = smul.addr %s160, 4
        %s162 = scalar_lea.vmem %s0, %s161
      $region28: #{res_down_block.3} parent=23 // pred_fallthru
        _
      // Predicated region
      $region29: #{res_down_block.3} parent=23 // pred_check
        %p163 = pneg %p98
      $region30: #{res_down_block.3} parent=23 // pred_check_branch
        %165 = sbr.rel (%p163) target = $region32
      $region31: #{res_down_block.3} parent=23 // pred_region
        %p166 = scmp.lt.s32.totalorder %s10, 1
        %s167 = scalar_select %p166, %s10, 1
        %s168 = smul.addr %s167, 8
        %s169 = smul.addr %s168, 8
        %s170 = scalar_lea.vmem %s3, %s169
      $region32: #{res_down_block.3} parent=23 // pred_fallthru
        _
    $region24: #{res_down_block.3} parent=5 // pred_fallthru
      _
    %p171 = scmp.le.s32.totalorder 1, %s10
    %p172 = scmp.lt.s32.totalorder %s10, 3
    %p173 = pnand %p171, %p172
    %p174 = pneg %p173
    // Predicated region
    $region33: #{res_down_block.3} parent=5 // pred_check
      _
    $region34: #{res_down_block.3} parent=5 // pred_check_branch
      %176 = sbr.rel (%p173) target = $region36
    $region35: #{res_down_block.3} parent=5 // pred_region
      %s177 = ssub.s32 %s10, 1
      %p178 = scmp.lt.s32.totalorder %s15, 1
      %s179 = scalar_select %p178, %s15, 1
      %s180 = smul.addr %s179, 20
      %s181 = smul.addr %s180, 4
      %s182 = scalar_lea.vmem %s0, %s181
      %p183 = pneg %p36
      %p184 = pneg %p33
      %p185 = pneg %p57
      %p186 = pneg %p54
      %p187 = pneg %p78
      %p188 = pneg %p75
      %p189 = scmp.lt.s32.totalorder %s15, 1
      %s190 = scalar_select %p189, %s15, 1
      %s191 = smul.addr %s190, 8
      %s192 = smul.addr %s191, 8
      %s193 = scalar_lea.vmem %s3, %s192
      %p194 = pneg %p104
      %p195 = pneg %p101
      %p196 = pneg %p130
      %p197 = pneg %p127
      %p198 = scmp.lt.s32.totalorder %s15, 1
      %s199 = scalar_select %p198, %s15, 1
      %s200 = smul.addr %s199, 8
      %s201 = smul.addr %s200, 8
      %s202 = scalar_lea.vmem %s4, %s201
      %p203 = scmp.lt.s32.totalorder %s15, 1
      %s204 = scalar_select %p203, %s15, 1
      %s205 = smul.addr %s204, 20
      %s206 = smul.addr %s205, 4
      %s207 = scalar_lea.vmem %s0, %s206
      %p208 = scmp.lt.s32.totalorder %s15, 1
      %s209 = scalar_select %p208, %s15, 1
      %s210 = smul.addr %s209, 8
      %s211 = smul.addr %s210, 8
      %s212 = scalar_lea.vmem %s3, %s211
      %p213 = scmp.lt.s32.totalorder %s15, 1
      %s214 = scalar_select %p213, %s15, 1
      %s215 = smul.addr %s214, 8
      %s216 = smul.addr %s215, 8
      %s217 = scalar_lea.vmem %s4, %s216
      %v219 = vld [vmem:[%s207] sm:$0xf]
      %v220 = vld [vmem:[%s207 + $0x4] sm:$0x1]
      %v221 = vld [vmem:[%s207 + $0x8] sm:$0xf]
      %v222 = vld [vmem:[%s207 + $0xc] sm:$0x1]
      %v223 = vld [vmem:[%s207 + $0x10] sm:$0xf]
      %v224 = vld [vmem:[%s207 + $0x14] sm:$0x1]
      %v225 = vld [vmem:[%s207 + $0x18] sm:$0xf]
      %v226 = vld [vmem:[%s207 + $0x1c] sm:$0x1]
      %v227 = vld [vmem:[%s207 + $0x20] sm:$0xf]
      %v228 = vld [vmem:[%s207 + $0x24] sm:$0x1]
      %v229 = vld [vmem:[%s207 + $0x28] sm:$0xf]
      %v230 = vld [vmem:[%s207 + $0x2c] sm:$0x1]
      %v231 = vld [vmem:[%s207 + $0x30] sm:$0xf]
      %v232 = vld [vmem:[%s207 + $0x34] sm:$0x1]
      %v233 = vld [vmem:[%s207 + $0x38] sm:$0xf]
      %v234 = vld [vmem:[%s207 + $0x3c] sm:$0x1]
      %v235 = vld [vmem:[%s207 + $0x40] sm:$0xf]
      %v236 = vld [vmem:[%s207 + $0x44] sm:$0x1]
      %v237 = vld [vmem:[%s207 + $0x48] sm:$0xf]
      %v238 = vld [vmem:[%s207 + $0x4c] sm:$0x1]
      %v239 = vunpack.c.l.bf16 %v219
      %v240 = vunpack.c.l.bf16 %v220
      %v241 = vunpack.c.l.bf16 %v221
      %v242 = vunpack.c.l.bf16 %v222
      %v243 = vunpack.c.l.bf16 %v223
      %v244 = vunpack.c.l.bf16 %v224
      %v245 = vunpack.c.l.bf16 %v225
      %v246 = vunpack.c.l.bf16 %v226
      %v247 = vunpack.c.l.bf16 %v227
      %v248 = vunpack.c.l.bf16 %v228
      %v249 = vunpack.c.l.bf16 %v229
      %v250 = vunpack.c.l.bf16 %v230
      %v251 = vunpack.c.l.bf16 %v231
      %v252 = vunpack.c.l.bf16 %v232
      %v253 = vunpack.c.l.bf16 %v233
      %v254 = vunpack.c.l.bf16 %v234
      %v255 = vunpack.c.l.bf16 %v235
      %v256 = vunpack.c.l.bf16 %v236
      %v257 = vunpack.c.l.bf16 %v237
      %v258 = vunpack.c.l.bf16 %v238
      %v259 = vpack.c.bf16 %v241, %v239
      %v260 = vpack.c.bf16 %v245, %v243
      %v261 = vpack.c.bf16 %v249, %v247
      %v262 = vpack.c.bf16 %v253, %v251
      %v263 = vld [vmem:[%s1] sm:$0xf]
      %v264 = vld [vmem:[%s1 + $0x4] sm:$0xf]
      %v265 = vld [vmem:[%s1 + $0x8] sm:$0xf]
      %v266 = vld [vmem:[%s1 + $0xc] sm:$0xf]
      %v267 = vld [vmem:[%s1 + $0x10] sm:$0xf]
      %v268 = vld [vmem:[%s1 + $0x14] sm:$0xf]
      %v269 = vld [vmem:[%s1 + $0x18] sm:$0xf]
      %v270 = vld [vmem:[%s1 + $0x1c] sm:$0xf]
      %v271 = vld [vmem:[%s1 + $0x20] sm:$0xf]
      %v272 = vld [vmem:[%s1 + $0x24] sm:$0xf]
      %v273 = vld [vmem:[%s1 + $0x28] sm:$0xf]
      %v274 = vld [vmem:[%s1 + $0x2c] sm:$0xf]
      %v275 = vld [vmem:[%s1 + $0x30] sm:$0xf]
      %v276 = vld [vmem:[%s1 + $0x34] sm:$0xf]
      %v277 = vld [vmem:[%s1 + $0x38] sm:$0xf]
      %v278 = vld [vmem:[%s1 + $0x3c] sm:$0xf]
      %vm295 = vcmask 1046528
      %v296 = vrot.slane %v239, 1
      %v297 = vrot.slane %v240, 1
      %v298 = vsel %vm295, %v296, %v297
      %v299 = vrot.slane %v241, 1
      %v300 = vrot.slane %v242, 1
      %v301 = vsel %vm295, %v299, %v300
      %v302 = vrot.slane %v243, 1
      %v303 = vrot.slane %v244, 1
      %v304 = vsel %vm295, %v302, %v303
      %v305 = vrot.slane %v245, 1
      %v306 = vrot.slane %v246, 1
      %v307 = vsel %vm295, %v305, %v306
      %v308 = vrot.slane %v247, 1
      %v309 = vrot.slane %v248, 1
      %v310 = vsel %vm295, %v308, %v309
      %v311 = vrot.slane %v249, 1
      %v312 = vrot.slane %v250, 1
      %v313 = vsel %vm295, %v311, %v312
      %v314 = vrot.slane %v251, 1
      %v315 = vrot.slane %v252, 1
      %v316 = vsel %vm295, %v314, %v315
      %v317 = vrot.slane %v253, 1
      %v318 = vrot.slane %v254, 1
      %v319 = vsel %vm295, %v317, %v318
      %v328 = vpack.c.bf16 %v301, %v298
      %v329 = vpack.c.bf16 %v307, %v304
      %v330 = vpack.c.bf16 %v313, %v310
      %v331 = vpack.c.bf16 %v319, %v316
      %s332 = scalar_lea.vmem %s1, 64
      %v333 = vld [vmem:[%s332] sm:$0xf]
      %v334 = vld [vmem:[%s332 + $0x4] sm:$0xf]
      %v335 = vld [vmem:[%s332 + $0x8] sm:$0xf]
      %v336 = vld [vmem:[%s332 + $0xc] sm:$0xf]
      %v337 = vld [vmem:[%s332 + $0x10] sm:$0xf]
      %v338 = vld [vmem:[%s332 + $0x14] sm:$0xf]
      %v339 = vld [vmem:[%s332 + $0x18] sm:$0xf]
      %v340 = vld [vmem:[%s332 + $0x1c] sm:$0xf]
      %v341 = vld [vmem:[%s332 + $0x20] sm:$0xf]
      %v342 = vld [vmem:[%s332 + $0x24] sm:$0xf]
      %v343 = vld [vmem:[%s332 + $0x28] sm:$0xf]
      %v344 = vld [vmem:[%s332 + $0x2c] sm:$0xf]
      %v345 = vld [vmem:[%s332 + $0x30] sm:$0xf]
      %v346 = vld [vmem:[%s332 + $0x34] sm:$0xf]
      %v347 = vld [vmem:[%s332 + $0x38] sm:$0xf]
      %v348 = vld [vmem:[%s332 + $0x3c] sm:$0xf]
      %v365 = vunpack.c.l.b16 %v333
      %v366 = vunpack.c.l.b16 %v334
      %v367 = vunpack.c.l.b16 %v335
      %v368 = vunpack.c.l.b16 %v336
      %v369 = vunpack.c.l.b16 %v337
      %v370 = vunpack.c.l.b16 %v338
      %v371 = vunpack.c.l.b16 %v339
      %v372 = vunpack.c.l.b16 %v340
      %v373 = vunpack.c.l.b16 %v341
      %v374 = vunpack.c.l.b16 %v342
      %v375 = vunpack.c.l.b16 %v343
      %v376 = vunpack.c.l.b16 %v344
      %v377 = vunpack.c.l.b16 %v345
      %v378 = vunpack.c.l.b16 %v346
      %v379 = vunpack.c.l.b16 %v347
      %v380 = vunpack.c.l.b16 %v348
      %v381 = vpack.c.b16 %v366, %v365
      %v382 = vpack.c.b16 %v368, %v367
      %v383 = vpack.c.b16 %v370, %v369
      %v384 = vpack.c.b16 %v372, %v371
      %v385 = vpack.c.b16 %v374, %v373
      %v386 = vpack.c.b16 %v376, %v375
      %v387 = vpack.c.b16 %v378, %v377
      %v388 = vpack.c.b16 %v380, %v379
      %397 = vmatprep.subr.bf16.mxu0 0
      %398 = vmatpush1.bf16.msra.mxu0 %v381
      %399 = vmatprep.subr.bf16.mxu0 0
      %400 = vmatpush1.bf16.msra.mxu0 %v382
      %401 = vmatprep.subr.bf16.mxu0 0
      %402 = vmatpush1.bf16.msra.mxu0 %v383
      %403 = vmatprep.subr.bf16.mxu0 0
      %404 = vmatpush1.bf16.msra.mxu0 %v384
      %405 = vmatprep.subr.bf16.mxu0 0
      %406 = vmatpush1.bf16.msra.mxu0 %v385
      %407 = vmatprep.subr.bf16.mxu0 0
      %408 = vmatpush1.bf16.msra.mxu0 %v386
      %409 = vmatprep.subr.bf16.mxu0 0
      %410 = vmatpush1.bf16.msra.mxu0 %v387
      %411 = vmatprep.subr.bf16.mxu0 0
      %412 = vmatpush1.bf16.msra.mxu0 %v388
      %413 = vmatprep.subr.bf16.mxu0 0
      %414 = vmatpush1.bf16.msra.mxu0 0
      %415 = vmatprep.subr.bf16.mxu0 0
      %416 = vmatpush1.bf16.msra.mxu0 0
      %417 = vmatprep.subr.bf16.mxu0 0
      %418 = vmatpush1.bf16.msra.mxu0 0
      %419 = vmatprep.subr.bf16.mxu0 0
      %420 = vmatpush1.bf16.msra.mxu0 0
      %421 = vmatprep.subr.bf16.mxu0 0
      %422 = vmatpush1.bf16.msra.mxu0 0
      %423 = vmatprep.subr.bf16.mxu0 0
      %424 = vmatpush1.bf16.msra.mxu0 0
      %425 = vmatprep.subr.bf16.mxu0 0
      %426 = vmatpush1.bf16.msra.mxu0 0
      %427 = vmatprep.subr.bf16.mxu0 0
      %428 = vmatpush1.bf16.msra.mxu0 0
      %429 = vmatprep.mubr.bf16.mxu0 0
      %430 = vmatmul.mubr.bf16.gmra.mrb[0].mxu0 %v328
      %v431 = vpop.f32.mrb[0].mxu0
      %v432 = vadd.f32 0.0, %v431
      %v433 = vpop.f32.mrb[0].mxu0
      %v434 = vpop.f32.mrb[0].mxu0
      %v435 = vadd.f32 0.0, %v434
      %v436 = vpop.f32.mrb[0].mxu0
      %437 = vmatprep.mubr.bf16.mxu0 0
      %438 = vmatmul.mubr.bf16.gmra.mrb[0].mxu0 %v329
      %v439 = vpop.f32.mrb[0].mxu0
      %v440 = vadd.f32 0.0, %v439
      %v441 = vpop.f32.mrb[0].mxu0
      %v442 = vpop.f32.mrb[0].mxu0
      %v443 = vadd.f32 0.0, %v442
      %v444 = vpop.f32.mrb[0].mxu0
      %445 = vmatprep.mubr.bf16.mxu0 0
      %446 = vmatmul.mubr.bf16.gmra.mrb[0].mxu0 %v330
      %v447 = vpop.f32.mrb[0].mxu0
      %v448 = vadd.f32 0.0, %v447
      %v449 = vpop.f32.mrb[0].mxu0
      %v450 = vpop.f32.mrb[0].mxu0
      %v451 = vadd.f32 0.0, %v450
      %v452 = vpop.f32.mrb[0].mxu0
      %453 = vmatprep.mubr.bf16.mxu0 0
      %454 = vmatmul.mubr.bf16.gmra.mrb[0].mxu0 %v331
      %v455 = vpop.f32.mrb[0].mxu0
      %v456 = vadd.f32 0.0, %v455
      %v457 = vpop.f32.mrb[0].mxu0
      %v458 = vpop.f32.mrb[0].mxu0
      %v459 = vadd.f32 0.0, %v458
      %v460 = vpop.f32.mrb[0].mxu0
      %461 = vdwg.mxu0
      %v478 = vunpack.c.l.b16 %v263
      %v479 = vunpack.c.l.b16 %v264
      %v480 = vunpack.c.l.b16 %v265
      %v481 = vunpack.c.l.b16 %v266
      %v482 = vunpack.c.l.b16 %v267
      %v483 = vunpack.c.l.b16 %v268
      %v484 = vunpack.c.l.b16 %v269
      %v485 = vunpack.c.l.b16 %v270
      %v486 = vunpack.c.l.b16 %v271
      %v487 = vunpack.c.l.b16 %v272
      %v488 = vunpack.c.l.b16 %v273
      %v489 = vunpack.c.l.b16 %v274
      %v490 = vunpack.c.l.b16 %v275
      %v491 = vunpack.c.l.b16 %v276
      %v492 = vunpack.c.l.b16 %v277
      %v493 = vunpack.c.l.b16 %v278
      %v494 = vpack.c.b16 %v479, %v478
      %v495 = vpack.c.b16 %v481, %v480
      %v496 = vpack.c.b16 %v483, %v482
      %v497 = vpack.c.b16 %v485, %v484
      %v498 = vpack.c.b16 %v487, %v486
      %v499 = vpack.c.b16 %v489, %v488
      %v500 = vpack.c.b16 %v491, %v490
      %v501 = vpack.c.b16 %v493, %v492
      %510 = vmatprep.subr.bf16.mxu0 0
      %511 = vmatpush1.bf16.msra.mxu0 %v494
      %512 = vmatprep.subr.bf16.mxu0 0
      %513 = vmatpush1.bf16.msra.mxu0 %v495
      %514 = vmatprep.subr.bf16.mxu0 0
      %515 = vmatpush1.bf16.msra.mxu0 %v496
      %516 = vmatprep.subr.bf16.mxu0 0
      %517 = vmatpush1.bf16.msra.mxu0 %v497
      %518 = vmatprep.subr.bf16.mxu0 0
      %519 = vmatpush1.bf16.msra.mxu0 %v498
      %520 = vmatprep.subr.bf16.mxu0 0
      %521 = vmatpush1.bf16.msra.mxu0 %v499
      %522 = vmatprep.subr.bf16.mxu0 0
      %523 = vmatpush1.bf16.msra.mxu0 %v500
      %524 = vmatprep.subr.bf16.mxu0 0
      %525 = vmatpush1.bf16.msra.mxu0 %v501
      %526 = vmatprep.subr.bf16.mxu0 0
      %527 = vmatpush1.bf16.msra.mxu0 0
      %528 = vmatprep.subr.bf16.mxu0 0
      %529 = vmatpush1.bf16.msra.mxu0 0
      %530 = vmatprep.subr.bf16.mxu0 0
      %531 = vmatpush1.bf16.msra.mxu0 0
      %532 = vmatprep.subr.bf16.mxu0 0
      %533 = vmatpush1.bf16.msra.mxu0 0
      %534 = vmatprep.subr.bf16.mxu0 0
      %535 = vmatpush1.bf16.msra.mxu0 0
      %536 = vmatprep.subr.bf16.mxu0 0
      %537 = vmatpush1.bf16.msra.mxu0 0
      %538 = vmatprep.subr.bf16.mxu0 0
      %539 = vmatpush1.bf16.msra.mxu0 0
      %540 = vmatprep.subr.bf16.mxu0 0
      %541 = vmatpush1.bf16.msra.mxu0 0
      %542 = vmatprep.mubr.bf16.mxu0 0
      %543 = vmatmul.mubr.bf16.gmra.mrb[0].mxu0 %v259
      %v544 = vpop.f32.mrb[0].mxu0
      %v545 = vadd.f32 %v432, %v544
      %v546 = vpop.f32.mrb[0].mxu0
      %v547 = vpop.f32.mrb[0].mxu0
      %v548 = vadd.f32 %v435, %v547
      %v549 = vpop.f32.mrb[0].mxu0
      %550 = vmatprep.mubr.bf16.mxu0 0
      %551 = vmatmul.mubr.bf16.gmra.mrb[0].mxu0 %v260
      %v552 = vpop.f32.mrb[0].mxu0
      %v553 = vadd.f32 %v440, %v552
      %v554 = vpop.f32.mrb[0].mxu0
      %v555 = vpop.f32.mrb[0].mxu0
      %v556 = vadd.f32 %v443, %v555
      %v557 = vpop.f32.mrb[0].mxu0
      %558 = vmatprep.mubr.bf16.mxu0 0
      %559 = vmatmul.mubr.bf16.gmra.mrb[0].mxu0 %v261
      %v560 = vpop.f32.mrb[0].mxu0
      %v561 = vadd.f32 %v448, %v560
      %v562 = vpop.f32.mrb[0].mxu0
      %v563 = vpop.f32.mrb[0].mxu0
      %v564 = vadd.f32 %v451, %v563
      %v565 = vpop.f32.mrb[0].mxu0
      %566 = vmatprep.mubr.bf16.mxu0 0
      %567 = vmatmul.mubr.bf16.gmra.mrb[0].mxu0 %v262
      %v568 = vpop.f32.mrb[0].mxu0
      %v569 = vadd.f32 %v456, %v568
      %v570 = vpop.f32.mrb[0].mxu0
      %v571 = vpop.f32.mrb[0].mxu0
      %v572 = vadd.f32 %v459, %v571
      %v573 = vpop.f32.mrb[0].mxu0
      %574 = vdwg.mxu0
      %vm575 = vcmask 1045504
      %v576 = vrot.slane %v239, 2
      %v577 = vrot.slane %v240, 2
      %v578 = vsel %vm575, %v576, %v577
      %v579 = vrot.slane %v241, 2
      %v580 = vrot.slane %v242, 2
      %v581 = vsel %vm575, %v579, %v580
      %v582 = vrot.slane %v243, 2
      %v583 = vrot.slane %v244, 2
      %v584 = vsel %vm575, %v582, %v583
      %v585 = vrot.slane %v245, 2
      %v586 = vrot.slane %v246, 2
      %v587 = vsel %vm575, %v585, %v586
      %v588 = vrot.slane %v247, 2
      %v589 = vrot.slane %v248, 2
      %v590 = vsel %vm575, %v588, %v589
      %v591 = vrot.slane %v249, 2
      %v592 = vrot.slane %v250, 2
      %v593 = vsel %vm575, %v591, %v592
      %v594 = vrot.slane %v251, 2
      %v595 = vrot.slane %v252, 2
      %v596 = vsel %vm575, %v594, %v595
      %v597 = vrot.slane %v253, 2
      %v598 = vrot.slane %v254, 2
      %v599 = vsel %vm575, %v597, %v598
      %v608 = vpack.c.bf16 %v581, %v578
      %v609 = vpack.c.bf16 %v587, %v584
      %v610 = vpack.c.bf16 %v593, %v590
      %v611 = vpack.c.bf16 %v599, %v596
      %s612 = scalar_lea.vmem %s1, 128
      %v613 = vld [vmem:[%s612] sm:$0xf]
      %v614 = vld [vmem:[%s612 + $0x4] sm:$0xf]
      %v615 = vld [vmem:[%s612 + $0x8] sm:$0xf]
      %v616 = vld [vmem:[%s612 + $0xc] sm:$0xf]
      %v617 = vld [vmem:[%s612 + $0x10] sm:$0xf]
      %v618 = vld [vmem:[%s612 + $0x14] sm:$0xf]
      %v619 = vld [vmem:[%s612 + $0x18] sm:$0xf]
      %v620 = vld [vmem:[%s612 + $0x1c] sm:$0xf]
      %v621 = vld [vmem:[%s612 + $0x20] sm:$0xf]
      %v622 = vld [vmem:[%s612 + $0x24] sm:$0xf]
      %v623 = vld [vmem:[%s612 + $0x28] sm:$0xf]
      %v624 = vld [vmem:[%s612 + $0x2c] sm:$0xf]
      %v625 = vld [vmem:[%s612 + $0x30] sm:$0xf]
      %v626 = vld [vmem:[%s612 + $0x34] sm:$0xf]
      %v627 = vld [vmem:[%s612 + $0x38] sm:$0xf]
      %v628 = vld [vmem:[%s612 + $0x3c] sm:$0xf]
      %v645 = vunpack.c.l.b16 %v613
      %v646 = vunpack.c.l.b16 %v614
      %v647 = vunpack.c.l.b16 %v615
      %v648 = vunpack.c.l.b16 %v616
      %v649 = vunpack.c.l.b16 %v617
      %v650 = vunpack.c.l.b16 %v618
      %v651 = vunpack.c.l.b16 %v619
      %v652 = vunpack.c.l.b16 %v620
      %v653 = vunpack.c.l.b16 %v621
      %v654 = vunpack.c.l.b16 %v622
      %v655 = vunpack.c.l.b16 %v623
      %v656 = vunpack.c.l.b16 %v624
      %v657 = vunpack.c.l.b16 %v625
      %v658 = vunpack.c.l.b16 %v626
      %v659 = vunpack.c.l.b16 %v627
      %v660 = vunpack.c.l.b16 %v628
      %v661 = vpack.c.b16 %v646, %v645
      %v662 = vpack.c.b16 %v648, %v647
      %v663 = vpack.c.b16 %v650, %v649
      %v664 = vpack.c.b16 %v652, %v651
      %v665 = vpack.c.b16 %v654, %v653
      %v666 = vpack.c.b16 %v656, %v655
      %v667 = vpack.c.b16 %v658, %v657
      %v668 = vpack.c.b16 %v660, %v659
      %677 = vmatprep.subr.bf16.mxu0 0
      %678 = vmatpush1.bf16.msra.mxu0 %v661
      %679 = vmatprep.subr.bf16.mxu0 0
      %680 = vmatpush1.bf16.msra.mxu0 %v662
      %681 = vmatprep.subr.bf16.mxu0 0
      %682 = vmatpush1.bf16.msra.mxu0 %v663
      %683 = vmatprep.subr.bf16.mxu0 0
      %684 = vmatpush1.bf16.msra.mxu0 %v664
      %685 = vmatprep.subr.bf16.mxu0 0
      %686 = vmatpush1.bf16.msra.mxu0 %v665
      %687 = vmatprep.subr.bf16.mxu0 0
      %688 = vmatpush1.bf16.msra.mxu0 %v666
      %689 = vmatprep.subr.bf16.mxu0 0
      %690 = vmatpush1.bf16.msra.mxu0 %v667
      %691 = vmatprep.subr.bf16.mxu0 0
      %692 = vmatpush1.bf16.msra.mxu0 %v668
      %693 = vmatprep.subr.bf16.mxu0 0
      %694 = vmatpush1.bf16.msra.mxu0 0
      %695 = vmatprep.subr.bf16.mxu0 0
      %696 = vmatpush1.bf16.msra.mxu0 0
      %697 = vmatprep.subr.bf16.mxu0 0
      %698 = vmatpush1.bf16.msra.mxu0 0
      %699 = vmatprep.subr.bf16.mxu0 0
      %700 = vmatpush1.bf16.msra.mxu0 0
      %701 = vmatprep.subr.bf16.mxu0 0
      %702 = vmatpush1.bf16.msra.mxu0 0
      %703 = vmatprep.subr.bf16.mxu0 0
      %704 = vmatpush1.bf16.msra.mxu0 0
      %705 = vmatprep.subr.bf16.mxu0 0
      %706 = vmatpush1.bf16.msra.mxu0 0
      %707 = vmatprep.subr.bf16.mxu0 0
      %708 = vmatpush1.bf16.msra.mxu0 0
      %709 = vmatprep.mubr.bf16.mxu0 0
      %710 = vmatmul.mubr.bf16.gmra.mrb[0].mxu0 %v608
      %v711 = vpop.f32.mrb[0].mxu0
      %v712 = vadd.f32 0.0, %v711
      %v713 = vpop.f32.mrb[0].mxu0
      %v714 = vpop.f32.mrb[0].mxu0
      %v715 = vadd.f32 0.0, %v714
      %v716 = vpop.f32.mrb[0].mxu0
      %717 = vmatprep.mubr.bf16.mxu0 0
      %718 = vmatmul.mubr.bf16.gmra.mrb[0].mxu0 %v609
      %v719 = vpop.f32.mrb[0].mxu0
      %v720 = vadd.f32 0.0, %v719
      %v721 = vpop.f32.mrb[0].mxu0
      %v722 = vpop.f32.mrb[0].mxu0
      %v723 = vadd.f32 0.0, %v722
      %v724 = vpop.f32.mrb[0].mxu0
      %725 = vmatprep.mubr.bf16.mxu0 0
      %726 = vmatmul.mubr.bf16.gmra.mrb[0].mxu0 %v610
      %v727 = vpop.f32.mrb[0].mxu0
      %v728 = vadd.f32 0.0, %v727
      %v729 = vpop.f32.mrb[0].mxu0
      %v730 = vpop.f32.mrb[0].mxu0
      %v731 = vadd.f32 0.0, %v730
      %v732 = vpop.f32.mrb[0].mxu0
      %733 = vmatprep.mubr.bf16.mxu0 0
      %734 = vmatmul.mubr.bf16.gmra.mrb[0].mxu0 %v611
      %v735 = vpop.f32.mrb[0].mxu0
      %v736 = vadd.f32 0.0, %v735
      %v737 = vpop.f32.mrb[0].mxu0
      %v738 = vpop.f32.mrb[0].mxu0
      %v739 = vadd.f32 0.0, %v738
      %v740 = vpop.f32.mrb[0].mxu0
      %741 = vdwg.mxu0
      %v742 = vadd.f32 %v545, %v712
      %v743 = vadd.f32 %v548, %v715
      %v744 = vadd.f32 %v553, %v720
      %v745 = vadd.f32 %v556, %v723
      %v746 = vadd.f32 %v561, %v728
      %v747 = vadd.f32 %v564, %v731
      %v748 = vadd.f32 %v569, %v736
      %v749 = vadd.f32 %v572, %v739
      %v750 = vpack.c.bf16 %v243, %v241
      %v751 = vpack.c.bf16 %v247, %v245
      %v752 = vpack.c.bf16 %v251, %v249
      %v753 = vpack.c.bf16 %v255, %v253
      %s754 = scalar_lea.vmem %s1, 192
      %v755 = vld [vmem:[%s754] sm:$0xf]
      %v756 = vld [vmem:[%s754 + $0x4] sm:$0xf]
      %v757 = vld [vmem:[%s754 + $0x8] sm:$0xf]
      %v758 = vld [vmem:[%s754 + $0xc] sm:$0xf]
      %v759 = vld [vmem:[%s754 + $0x10] sm:$0xf]
      %v760 = vld [vmem:[%s754 + $0x14] sm:$0xf]
      %v761 = vld [vmem:[%s754 + $0x18] sm:$0xf]
      %v762 = vld [vmem:[%s754 + $0x1c] sm:$0xf]
      %v763 = vld [vmem:[%s754 + $0x20] sm:$0xf]
      %v764 = vld [vmem:[%s754 + $0x24] sm:$0xf]
      %v765 = vld [vmem:[%s754 + $0x28] sm:$0xf]
      %v766 = vld [vmem:[%s754 + $0x2c] sm:$0xf]
      %v767 = vld [vmem:[%s754 + $0x30] sm:$0xf]
      %v768 = vld [vmem:[%s754 + $0x34] sm:$0xf]
      %v769 = vld [vmem:[%s754 + $0x38] sm:$0xf]
      %v770 = vld [vmem:[%s754 + $0x3c] sm:$0xf]
      %v787 = vunpack.c.l.b16 %v755
      %v788 = vunpack.c.l.b16 %v756
      %v789 = vunpack.c.l.b16 %v757
      %v790 = vunpack.c.l.b16 %v758
      %v791 = vunpack.c.l.b16 %v759
      %v792 = vunpack.c.l.b16 %v760
      %v793 = vunpack.c.l.b16 %v761
      %v794 = vunpack.c.l.b16 %v762
      %v795 = vunpack.c.l.b16 %v763
      %v796 = vunpack.c.l.b16 %v764
      %v797 = vunpack.c.l.b16 %v765
      %v798 = vunpack.c.l.b16 %v766
      %v799 = vunpack.c.l.b16 %v767
      %v800 = vunpack.c.l.b16 %v768
      %v801 = vunpack.c.l.b16 %v769
      %v802 = vunpack.c.l.b16 %v770
      %v803 = vpack.c.b16 %v788, %v787
      %v804 = vpack.c.b16 %v790, %v789
      %v805 = vpack.c.b16 %v792, %v791
      %v806 = vpack.c.b16 %v794, %v793
      %v807 = vpack.c.b16 %v796, %v795
      %v808 = vpack.c.b16 %v798, %v797
      %v809 = vpack.c.b16 %v800, %v799
      %v810 = vpack.c.b16 %v802, %v801
      %819 = vmatprep.subr.bf16.mxu0 0
      %820 = vmatpush1.bf16.msra.mxu0 %v803
      %821 = vmatprep.subr.bf16.mxu0 0
      %822 = vmatpush1.bf16.msra.mxu0 %v804
      %823 = vmatprep.subr.bf16.mxu0 0
      %824 = vmatpush1.bf16.msra.mxu0 %v805
      %825 = vmatprep.subr.bf16.mxu0 0
      %826 = vmatpush1.bf16.msra.mxu0 %v806
      %827 = vmatprep.subr.bf16.mxu0 0
      %828 = vmatpush1.bf16.msra.mxu0 %v807
      %829 = vmatprep.subr.bf16.mxu0 0
      %830 = vmatpush1.bf16.msra.mxu0 %v808
      %831 = vmatprep.subr.bf16.mxu0 0
      %832 = vmatpush1.bf16.msra.mxu0 %v809
      %833 = vmatprep.subr.bf16.mxu0 0
      %834 = vmatpush1.bf16.msra.mxu0 %v810
      %835 = vmatprep.subr.bf16.mxu0 0
      %836 = vmatpush1.bf16.msra.mxu0 0
      %837 = vmatprep.subr.bf16.mxu0 0
      %838 = vmatpush1.bf16.msra.mxu0 0
      %839 = vmatprep.subr.bf16.mxu0 0
      %840 = vmatpush1.bf16.msra.mxu0 0
      %841 = vmatprep.subr.bf16.mxu0 0
      %842 = vmatpush1.bf16.msra.mxu0 0
      %843 = vmatprep.subr.bf16.mxu0 0
      %844 = vmatpush1.bf16.msra.mxu0 0
      %845 = vmatprep.subr.bf16.mxu0 0
      %846 = vmatpush1.bf16.msra.mxu0 0
      %847 = vmatprep.subr.bf16.mxu0 0
      %848 = vmatpush1.bf16.msra.mxu0 0
      %849 = vmatprep.subr.bf16.mxu0 0
      %850 = vmatpush1.bf16.msra.mxu0 0
      %851 = vmatprep.mubr.bf16.mxu0 0
      %852 = vmatmul.mubr.bf16.gmra.mrb[0].mxu0 %v750
      %v853 = vpop.f32.mrb[0].mxu0
      %v854 = vadd.f32 0.0, %v853
      %v855 = vpop.f32.mrb[0].mxu0
      %v856 = vpop.f32.mrb[0].mxu0
      %v857 = vadd.f32 0.0, %v856
      %v858 = vpop.f32.mrb[0].mxu0
      %859 = vmatprep.mubr.bf16.mxu0 0
      %860 = vmatmul.mubr.bf16.gmra.mrb[0].mxu0 %v751
      %v861 = vpop.f32.mrb[0].mxu0
      %v862 = vadd.f32 0.0, %v861
      %v863 = vpop.f32.mrb[0].mxu0
      %v864 = vpop.f32.mrb[0].mxu0
      %v865 = vadd.f32 0.0, %v864
      %v866 = vpop.f32.mrb[0].mxu0
      %867 = vmatprep.mubr.bf16.mxu0 0
      %868 = vmatmul.mubr.bf16.gmra.mrb[0].mxu0 %v752
      %v869 = vpop.f32.mrb[0].mxu0
      %v870 = vadd.f32 0.0, %v869
      %v871 = vpop.f32.mrb[0].mxu0
      %v872 = vpop.f32.mrb[0].mxu0
      %v873 = vadd.f32 0.0, %v872
      %v874 = vpop.f32.mrb[0].mxu0
      %875 = vmatprep.mubr.bf16.mxu0 0
      %876 = vmatmul.mubr.bf16.gmra.mrb[0].mxu0 %v753
      %v877 = vpop.f32.mrb[0].mxu0
      %v878 = vadd.f32 0.0, %v877
      %v879 = vpop.f32.mrb[0].mxu0
      %v880 = vpop.f32.mrb[0].mxu0
      %v881 = vadd.f32 0.0, %v880
      %v882 = vpop.f32.mrb[0].mxu0
      %883 = vdwg.mxu0
      %v884 = vadd.f32 %v742, %v854
      %v885 = vadd.f32 %v743, %v857
      %v886 = vadd.f32 %v744, %v862
      %v887 = vadd.f32 %v745, %v865
      %v888 = vadd.f32 %v746, %v870
      %v889 = vadd.f32 %v747, %v873
      %v890 = vadd.f32 %v748, %v878
      %v891 = vadd.f32 %v749, %v881
      %v894 = vrot.slane %v255, 1
      %v895 = vrot.slane %v256, 1
      %v896 = vsel %vm295, %v894, %v895
      %v898 = vpack.c.bf16 %v304, %v301
      %v899 = vpack.c.bf16 %v310, %v307
      %v900 = vpack.c.bf16 %v316, %v313
      %v901 = vpack.c.bf16 %v896, %v319
      %s902 = scalar_lea.vmem %s1, 256
      %v903 = vld [vmem:[%s902] sm:$0xf]
      %v904 = vld [vmem:[%s902 + $0x4] sm:$0xf]
      %v905 = vld [vmem:[%s902 + $0x8] sm:$0xf]
      %v906 = vld [vmem:[%s902 + $0xc] sm:$0xf]
      %v907 = vld [vmem:[%s902 + $0x10] sm:$0xf]
      %v908 = vld [vmem:[%s902 + $0x14] sm:$0xf]
      %v909 = vld [vmem:[%s902 + $0x18] sm:$0xf]
      %v910 = vld [vmem:[%s902 + $0x1c] sm:$0xf]
      %v911 = vld [vmem:[%s902 + $0x20] sm:$0xf]
      %v912 = vld [vmem:[%s902 + $0x24] sm:$0xf]
      %v913 = vld [vmem:[%s902 + $0x28] sm:$0xf]
      %v914 = vld [vmem:[%s902 + $0x2c] sm:$0xf]
      %v915 = vld [vmem:[%s902 + $0x30] sm:$0xf]
      %v916 = vld [vmem:[%s902 + $0x34] sm:$0xf]
      %v917 = vld [vmem:[%s902 + $0x38] sm:$0xf]
      %v918 = vld [vmem:[%s902 + $0x3c] sm:$0xf]
      %v935 = vunpack.c.l.b16 %v903
      %v936 = vunpack.c.l.b16 %v904
      %v937 = vunpack.c.l.b16 %v905
      %v938 = vunpack.c.l.b16 %v906
      %v939 = vunpack.c.l.b16 %v907
      %v940 = vunpack.c.l.b16 %v908
      %v941 = vunpack.c.l.b16 %v909
      %v942 = vunpack.c.l.b16 %v910
      %v943 = vunpack.c.l.b16 %v911
      %v944 = vunpack.c.l.b16 %v912
      %v945 = vunpack.c.l.b16 %v913
      %v946 = vunpack.c.l.b16 %v914
      %v947 = vunpack.c.l.b16 %v915
      %v948 = vunpack.c.l.b16 %v916
      %v949 = vunpack.c.l.b16 %v917
      %v950 = vunpack.c.l.b16 %v918
      %v951 = vpack.c.b16 %v936, %v935
      %v952 = vpack.c.b16 %v938, %v937
      %v953 = vpack.c.b16 %v940, %v939
      %v954 = vpack.c.b16 %v942, %v941
      %v955 = vpack.c.b16 %v944, %v943
      %v956 = vpack.c.b16 %v946, %v945
      %v957 = vpack.c.b16 %v948, %v947
      %v958 = vpack.c.b16 %v950, %v949
      %967 = vmatprep.subr.bf16.mxu0 0
      %968 = vmatpush1.bf16.msra.mxu0 %v951
      %969 = vmatprep.subr.bf16.mxu0 0
      %970 = vmatpush1.bf16.msra.mxu0 %v952
      %971 = vmatprep.subr.bf16.mxu0 0
      %972 = vmatpush1.bf16.msra.mxu0 %v953
      %973 = vmatprep.subr.bf16.mxu0 0
      %974 = vmatpush1.bf16.msra.mxu0 %v954
      %975 = vmatprep.subr.bf16.mxu0 0
      %976 = vmatpush1.bf16.msra.mxu0 %v955
      %977 = vmatprep.subr.bf16.mxu0 0
      %978 = vmatpush1.bf16.msra.mxu0 %v956
      %979 = vmatprep.subr.bf16.mxu0 0
      %980 = vmatpush1.bf16.msra.mxu0 %v957
      %981 = vmatprep.subr.bf16.mxu0 0
      %982 = vmatpush1.bf16.msra.mxu0 %v958
      %983 = vmatprep.subr.bf16.mxu0 0
      %984 = vmatpush1.bf16.msra.mxu0 0
      %985 = vmatprep.subr.bf16.mxu0 0
      %986 = vmatpush1.bf16.msra.mxu0 0
      %987 = vmatprep.subr.bf16.mxu0 0
      %988 = vmatpush1.bf16.msra.mxu0 0
      %989 = vmatprep.subr.bf16.mxu0 0
      %990 = vmatpush1.bf16.msra.mxu0 0
      %991 = vmatprep.subr.bf16.mxu0 0
      %992 = vmatpush1.bf16.msra.mxu0 0
      %993 = vmatprep.subr.bf16.mxu0 0
      %994 = vmatpush1.bf16.msra.mxu0 0
      %995 = vmatprep.subr.bf16.mxu0 0
      %996 = vmatpush1.bf16.msra.mxu0 0
      %997 = vmatprep.subr.bf16.mxu0 0
      %998 = vmatpush1.bf16.msra.mxu0 0
      %999 = vmatprep.mubr.bf16.mxu0 0
      %1000 = vmatmul.mubr.bf16.gmra.mrb[0].mxu0 %v898
      %v1001 = vpop.f32.mrb[0].mxu0
      %v1002 = vadd.f32 0.0, %v1001
      %v1003 = vpop.f32.mrb[0].mxu0
      %v1004 = vpop.f32.mrb[0].mxu0
      %v1005 = vadd.f32 0.0, %v1004
      %v1006 = vpop.f32.mrb[0].mxu0
      %1007 = vmatprep.mubr.bf16.mxu0 0
      %1008 = vmatmul.mubr.bf16.gmra.mrb[0].mxu0 %v899
      %v1009 = vpop.f32.mrb[0].mxu0
      %v1010 = vadd.f32 0.0, %v1009
      %v1011 = vpop.f32.mrb[0].mxu0
      %v1012 = vpop.f32.mrb[0].mxu0
      %v1013 = vadd.f32 0.0, %v1012
      %v1014 = vpop.f32.mrb[0].mxu0
      %1015 = vmatprep.mubr.bf16.mxu0 0
      %1016 = vmatmul.mubr.bf16.gmra.mrb[0].mxu0 %v900
      %v1017 = vpop.f32.mrb[0].mxu0
      %v1018 = vadd.f32 0.0, %v1017
      %v1019 = vpop.f32.mrb[0].mxu0
      %v1020 = vpop.f32.mrb[0].mxu0
      %v1021 = vadd.f32 0.0, %v1020
      %v1022 = vpop.f32.mrb[0].mxu0
      %1023 = vmatprep.mubr.bf16.mxu0 0
      %1024 = vmatmul.mubr.bf16.gmra.mrb[0].mxu0 %v901
      %v1025 = vpop.f32.mrb[0].mxu0
      %v1026 = vadd.f32 0.0, %v1025
      %v1027 = vpop.f32.mrb[0].mxu0
      %v1028 = vpop.f32.mrb[0].mxu0
      %v1029 = vadd.f32 0.0, %v1028
      %v1030 = vpop.f32.mrb[0].mxu0
      %1031 = vdwg.mxu0
      %v1032 = vadd.f32 %v884, %v1002
      %v1033 = vadd.f32 %v885, %v1005
      %v1034 = vadd.f32 %v886, %v1010
      %v1035 = vadd.f32 %v887, %v1013
      %v1036 = vadd.f32 %v888, %v1018
      %v1037 = vadd.f32 %v889, %v1021
      %v1038 = vadd.f32 %v890, %v1026
      %v1039 = vadd.f32 %v891, %v1029
      %v1040 = vrot.slane %v255, 2
      %v1041 = vrot.slane %v256, 2
      %v1042 = vsel %vm575, %v1040, %v1041
      %v1044 = vpack.c.bf16 %v584, %v581
      %v1045 = vpack.c.bf16 %v590, %v587
      %v1046 = vpack.c.bf16 %v596, %v593
      %v1047 = vpack.c.bf16 %v1042, %v599
      %s1048 = scalar_lea.vmem %s1, 320
      %v1049 = vld [vmem:[%s1048] sm:$0xf]
      %v1050 = vld [vmem:[%s1048 + $0x4] sm:$0xf]
      %v1051 = vld [vmem:[%s1048 + $0x8] sm:$0xf]
      %v1052 = vld [vmem:[%s1048 + $0xc] sm:$0xf]
      %v1053 = vld [vmem:[%s1048 + $0x10] sm:$0xf]
      %v1054 = vld [vmem:[%s1048 + $0x14] sm:$0xf]
      %v1055 = vld [vmem:[%s1048 + $0x18] sm:$0xf]
      %v1056 = vld [vmem:[%s1048 + $0x1c] sm:$0xf]
      %v1057 = vld [vmem:[%s1048 + $0x20] sm:$0xf]
      %v1058 = vld [vmem:[%s1048 + $0x24] sm:$0xf]
      %v1059 = vld [vmem:[%s1048 + $0x28] sm:$0xf]
      %v1060 = vld [vmem:[%s1048 + $0x2c] sm:$0xf]
      %v1061 = vld [vmem:[%s1048 + $0x30] sm:$0xf]
      %v1062 = vld [vmem:[%s1048 + $0x34] sm:$0xf]
      %v1063 = vld [vmem:[%s1048 + $0x38] sm:$0xf]
      %v1064 = vld [vmem:[%s1048 + $0x3c] sm:$0xf]
      %v1081 = vunpack.c.l.b16 %v1049
      %v1082 = vunpack.c.l.b16 %v1050
      %v1083 = vunpack.c.l.b16 %v1051
      %v1084 = vunpack.c.l.b16 %v1052
      %v1085 = vunpack.c.l.b16 %v1053
      %v1086 = vunpack.c.l.b16 %v1054
      %v1087 = vunpack.c.l.b16 %v1055
      %v1088 = vunpack.c.l.b16 %v1056
      %v1089 = vunpack.c.l.b16 %v1057
      %v1090 = vunpack.c.l.b16 %v1058
      %v1091 = vunpack.c.l.b16 %v1059
      %v1092 = vunpack.c.l.b16 %v1060
      %v1093 = vunpack.c.l.b16 %v1061
      %v1094 = vunpack.c.l.b16 %v1062
      %v1095 = vunpack.c.l.b16 %v1063
      %v1096 = vunpack.c.l.b16 %v1064
      %v1097 = vpack.c.b16 %v1082, %v1081
      %v1098 = vpack.c.b16 %v1084, %v1083
      %v1099 = vpack.c.b16 %v1086, %v1085
      %v1100 = vpack.c.b16 %v1088, %v1087
      %v1101 = vpack.c.b16 %v1090, %v1089
      %v1102 = vpack.c.b16 %v1092, %v1091
      %v1103 = vpack.c.b16 %v1094, %v1093
      %v1104 = vpack.c.b16 %v1096, %v1095
      %1113 = vmatprep.subr.bf16.mxu0 0
      %1114 = vmatpush1.bf16.msra.mxu0 %v1097
      %1115 = vmatprep.subr.bf16.mxu0 0
      %1116 = vmatpush1.bf16.msra.mxu0 %v1098
      %1117 = vmatprep.subr.bf16.mxu0 0
      %1118 = vmatpush1.bf16.msra.mxu0 %v1099
      %1119 = vmatprep.subr.bf16.mxu0 0
      %1120 = vmatpush1.bf16.msra.mxu0 %v1100
      %1121 = vmatprep.subr.bf16.mxu0 0
      %1122 = vmatpush1.bf16.msra.mxu0 %v1101
      %1123 = vmatprep.subr.bf16.mxu0 0
      %1124 = vmatpush1.bf16.msra.mxu0 %v1102
      %1125 = vmatprep.subr.bf16.mxu0 0
      %1126 = vmatpush1.bf16.msra.mxu0 %v1103
      %1127 = vmatprep.subr.bf16.mxu0 0
      %1128 = vmatpush1.bf16.msra.mxu0 %v1104
      %1129 = vmatprep.subr.bf16.mxu0 0
      %1130 = vmatpush1.bf16.msra.mxu0 0
      %1131 = vmatprep.subr.bf16.mxu0 0
      %1132 = vmatpush1.bf16.msra.mxu0 0
      %1133 = vmatprep.subr.bf16.mxu0 0
      %1134 = vmatpush1.bf16.msra.mxu0 0
      %1135 = vmatprep.subr.bf16.mxu0 0
      %1136 = vmatpush1.bf16.msra.mxu0 0
      %1137 = vmatprep.subr.bf16.mxu0 0
      %1138 = vmatpush1.bf16.msra.mxu0 0
      %1139 = vmatprep.subr.bf16.mxu0 0
      %1140 = vmatpush1.bf16.msra.mxu0 0
      %1141 = vmatprep.subr.bf16.mxu0 0
      %1142 = vmatpush1.bf16.msra.mxu0 0
      %1143 = vmatprep.subr.bf16.mxu0 0
      %1144 = vmatpush1.bf16.msra.mxu0 0
      %1145 = vmatprep.mubr.bf16.mxu0 0
      %1146 = vmatmul.mubr.bf16.gmra.mrb[0].mxu0 %v1044
      %v1147 = vpop.f32.mrb[0].mxu0
      %v1148 = vadd.f32 0.0, %v1147
      %v1149 = vpop.f32.mrb[0].mxu0
      %v1150 = vpop.f32.mrb[0].mxu0
      %v1151 = vadd.f32 0.0, %v1150
      %v1152 = vpop.f32.mrb[0].mxu0
      %1153 = vmatprep.mubr.bf16.mxu0 0
      %1154 = vmatmul.mubr.bf16.gmra.mrb[0].mxu0 %v1045
      %v1155 = vpop.f32.mrb[0].mxu0
      %v1156 = vadd.f32 0.0, %v1155
      %v1157 = vpop.f32.mrb[0].mxu0
      %v1158 = vpop.f32.mrb[0].mxu0
      %v1159 = vadd.f32 0.0, %v1158
      %v1160 = vpop.f32.mrb[0].mxu0
      %1161 = vmatprep.mubr.bf16.mxu0 0
      %1162 = vmatmul.mubr.bf16.gmra.mrb[0].mxu0 %v1046
      %v1163 = vpop.f32.mrb[0].mxu0
      %v1164 = vadd.f32 0.0, %v1163
      %v1165 = vpop.f32.mrb[0].mxu0
      %v1166 = vpop.f32.mrb[0].mxu0
      %v1167 = vadd.f32 0.0, %v1166
      %v1168 = vpop.f32.mrb[0].mxu0
      %1169 = vmatprep.mubr.bf16.mxu0 0
      %1170 = vmatmul.mubr.bf16.gmra.mrb[0].mxu0 %v1047
      %v1171 = vpop.f32.mrb[0].mxu0
      %v1172 = vadd.f32 0.0, %v1171
      %v1173 = vpop.f32.mrb[0].mxu0
      %v1174 = vpop.f32.mrb[0].mxu0
      %v1175 = vadd.f32 0.0, %v1174
      %v1176 = vpop.f32.mrb[0].mxu0
      %1177 = vdwg.mxu0
      %v1178 = vadd.f32 %v1032, %v1148
      %v1179 = vadd.f32 %v1033, %v1151
      %v1180 = vadd.f32 %v1034, %v1156
      %v1181 = vadd.f32 %v1035, %v1159
      %v1182 = vadd.f32 %v1036, %v1164
      %v1183 = vadd.f32 %v1037, %v1167
      %v1184 = vadd.f32 %v1038, %v1172
      %v1185 = vadd.f32 %v1039, %v1175
      %v1186 = vpack.c.bf16 %v257, %v255
      %s1187 = scalar_lea.vmem %s1, 384
      %v1188 = vld [vmem:[%s1187] sm:$0xf]
      %v1189 = vld [vmem:[%s1187 + $0x4] sm:$0xf]
      %v1190 = vld [vmem:[%s1187 + $0x8] sm:$0xf]
      %v1191 = vld [vmem:[%s1187 + $0xc] sm:$0xf]
      %v1192 = vld [vmem:[%s1187 + $0x10] sm:$0xf]
      %v1193 = vld [vmem:[%s1187 + $0x14] sm:$0xf]
      %v1194 = vld [vmem:[%s1187 + $0x18] sm:$0xf]
      %v1195 = vld [vmem:[%s1187 + $0x1c] sm:$0xf]
      %v1196 = vld [vmem:[%s1187 + $0x20] sm:$0xf]
      %v1197 = vld [vmem:[%s1187 + $0x24] sm:$0xf]
      %v1198 = vld [vmem:[%s1187 + $0x28] sm:$0xf]
      %v1199 = vld [vmem:[%s1187 + $0x2c] sm:$0xf]
      %v1200 = vld [vmem:[%s1187 + $0x30] sm:$0xf]
      %v1201 = vld [vmem:[%s1187 + $0x34] sm:$0xf]
      %v1202 = vld [vmem:[%s1187 + $0x38] sm:$0xf]
      %v1203 = vld [vmem:[%s1187 + $0x3c] sm:$0xf]
      %v1220 = vunpack.c.l.b16 %v1188
      %v1221 = vunpack.c.l.b16 %v1189
      %v1222 = vunpack.c.l.b16 %v1190
      %v1223 = vunpack.c.l.b16 %v1191
      %v1224 = vunpack.c.l.b16 %v1192
      %v1225 = vunpack.c.l.b16 %v1193
      %v1226 = vunpack.c.l.b16 %v1194
      %v1227 = vunpack.c.l.b16 %v1195
      %v1228 = vunpack.c.l.b16 %v1196
      %v1229 = vunpack.c.l.b16 %v1197
      %v1230 = vunpack.c.l.b16 %v1198
      %v1231 = vunpack.c.l.b16 %v1199
      %v1232 = vunpack.c.l.b16 %v1200
      %v1233 = vunpack.c.l.b16 %v1201
      %v1234 = vunpack.c.l.b16 %v1202
      %v1235 = vunpack.c.l.b16 %v1203
      %v1236 = vpack.c.b16 %v1221, %v1220
      %v1237 = vpack.c.b16 %v1223, %v1222
      %v1238 = vpack.c.b16 %v1225, %v1224
      %v1239 = vpack.c.b16 %v1227, %v1226
      %v1240 = vpack.c.b16 %v1229, %v1228
      %v1241 = vpack.c.b16 %v1231, %v1230
      %v1242 = vpack.c.b16 %v1233, %v1232
      %v1243 = vpack.c.b16 %v1235, %v1234
      %1252 = vmatprep.subr.bf16.mxu0 0
      %1253 = vmatpush1.bf16.msra.mxu0 %v1236
      %1254 = vmatprep.subr.bf16.mxu0 0
      %1255 = vmatpush1.bf16.msra.mxu0 %v1237
      %1256 = vmatprep.subr.bf16.mxu0 0
      %1257 = vmatpush1.bf16.msra.mxu0 %v1238
      %1258 = vmatprep.subr.bf16.mxu0 0
      %1259 = vmatpush1.bf16.msra.mxu0 %v1239
      %1260 = vmatprep.subr.bf16.mxu0 0
      %1261 = vmatpush1.bf16.msra.mxu0 %v1240
      %1262 = vmatprep.subr.bf16.mxu0 0
      %1263 = vmatpush1.bf16.msra.mxu0 %v1241
      %1264 = vmatprep.subr.bf16.mxu0 0
      %1265 = vmatpush1.bf16.msra.mxu0 %v1242
      %1266 = vmatprep.subr.bf16.mxu0 0
      %1267 = vmatpush1.bf16.msra.mxu0 %v1243
      %1268 = vmatprep.subr.bf16.mxu0 0
      %1269 = vmatpush1.bf16.msra.mxu0 0
      %1270 = vmatprep.subr.bf16.mxu0 0
      %1271 = vmatpush1.bf16.msra.mxu0 0
      %1272 = vmatprep.subr.bf16.mxu0 0
      %1273 = vmatpush1.bf16.msra.mxu0 0
      %1274 = vmatprep.subr.bf16.mxu0 0
      %1275 = vmatpush1.bf16.msra.mxu0 0
      %1276 = vmatprep.subr.bf16.mxu0 0
      %1277 = vmatpush1.bf16.msra.mxu0 0
      %1278 = vmatprep.subr.bf16.mxu0 0
      %1279 = vmatpush1.bf16.msra.mxu0 0
      %1280 = vmatprep.subr.bf16.mxu0 0
      %1281 = vmatpush1.bf16.msra.mxu0 0
      %1282 = vmatprep.subr.bf16.mxu0 0
      %1283 = vmatpush1.bf16.msra.mxu0 0
      %1284 = vmatprep.mubr.bf16.mxu0 0
      %1285 = vmatmul.mubr.bf16.gmra.mrb[0].mxu0 %v260
      %v1286 = vpop.f32.mrb[0].mxu0
      %v1287 = vadd.f32 0.0, %v1286
      %v1288 = vpop.f32.mrb[0].mxu0
      %v1289 = vpop.f32.mrb[0].mxu0
      %v1290 = vadd.f32 0.0, %v1289
      %v1291 = vpop.f32.mrb[0].mxu0
      %1292 = vmatprep.mubr.bf16.mxu0 0
      %1293 = vmatmul.mubr.bf16.gmra.mrb[0].mxu0 %v261
      %v1294 = vpop.f32.mrb[0].mxu0
      %v1295 = vadd.f32 0.0, %v1294
      %v1296 = vpop.f32.mrb[0].mxu0
      %v1297 = vpop.f32.mrb[0].mxu0
      %v1298 = vadd.f32 0.0, %v1297
      %v1299 = vpop.f32.mrb[0].mxu0
      %1300 = vmatprep.mubr.bf16.mxu0 0
      %1301 = vmatmul.mubr.bf16.gmra.mrb[0].mxu0 %v262
      %v1302 = vpop.f32.mrb[0].mxu0
      %v1303 = vadd.f32 0.0, %v1302
      %v1304 = vpop.f32.mrb[0].mxu0
      %v1305 = vpop.f32.mrb[0].mxu0
      %v1306 = vadd.f32 0.0, %v1305
      %v1307 = vpop.f32.mrb[0].mxu0
      %1308 = vmatprep.mubr.bf16.mxu0 0
      %1309 = vmatmul.mubr.bf16.gmra.mrb[0].mxu0 %v1186
      %v1310 = vpop.f32.mrb[0].mxu0
      %v1311 = vadd.f32 0.0, %v1310
      %v1312 = vpop.f32.mrb[0].mxu0
      %v1313 = vpop.f32.mrb[0].mxu0
      %v1314 = vadd.f32 0.0, %v1313
      %v1315 = vpop.f32.mrb[0].mxu0
      %1316 = vdwg.mxu0
      %v1317 = vadd.f32 %v1178, %v1287
      %v1318 = vadd.f32 %v1179, %v1290
      %v1319 = vadd.f32 %v1180, %v1295
      %v1320 = vadd.f32 %v1181, %v1298
      %v1321 = vadd.f32 %v1182, %v1303
      %v1322 = vadd.f32 %v1183, %v1306
      %v1323 = vadd.f32 %v1184, %v1311
      %v1324 = vadd.f32 %v1185, %v1314
      %v1327 = vrot.slane %v257, 1
      %v1328 = vrot.slane %v258, 1
      %v1329 = vsel %vm295, %v1327, %v1328
      %v1331 = vpack.c.bf16 %v1329, %v896
      %s1332 = scalar_lea.vmem %s1, 448
      %v1333 = vld [vmem:[%s1332] sm:$0xf]
      %v1334 = vld [vmem:[%s1332 + $0x4] sm:$0xf]
      %v1335 = vld [vmem:[%s1332 + $0x8] sm:$0xf]
      %v1336 = vld [vmem:[%s1332 + $0xc] sm:$0xf]
      %v1337 = vld [vmem:[%s1332 + $0x10] sm:$0xf]
      %v1338 = vld [vmem:[%s1332 + $0x14] sm:$0xf]
      %v1339 = vld [vmem:[%s1332 + $0x18] sm:$0xf]
      %v1340 = vld [vmem:[%s1332 + $0x1c] sm:$0xf]
      %v1341 = vld [vmem:[%s1332 + $0x20] sm:$0xf]
      %v1342 = vld [vmem:[%s1332 + $0x24] sm:$0xf]
      %v1343 = vld [vmem:[%s1332 + $0x28] sm:$0xf]
      %v1344 = vld [vmem:[%s1332 + $0x2c] sm:$0xf]
      %v1345 = vld [vmem:[%s1332 + $0x30] sm:$0xf]
      %v1346 = vld [vmem:[%s1332 + $0x34] sm:$0xf]
      %v1347 = vld [vmem:[%s1332 + $0x38] sm:$0xf]
      %v1348 = vld [vmem:[%s1332 + $0x3c] sm:$0xf]
      %v1365 = vunpack.c.l.b16 %v1333
      %v1366 = vunpack.c.l.b16 %v1334
      %v1367 = vunpack.c.l.b16 %v1335
      %v1368 = vunpack.c.l.b16 %v1336
      %v1369 = vunpack.c.l.b16 %v1337
      %v1370 = vunpack.c.l.b16 %v1338
      %v1371 = vunpack.c.l.b16 %v1339
      %v1372 = vunpack.c.l.b16 %v1340
      %v1373 = vunpack.c.l.b16 %v1341
      %v1374 = vunpack.c.l.b16 %v1342
      %v1375 = vunpack.c.l.b16 %v1343
      %v1376 = vunpack.c.l.b16 %v1344
      %v1377 = vunpack.c.l.b16 %v1345
      %v1378 = vunpack.c.l.b16 %v1346
      %v1379 = vunpack.c.l.b16 %v1347
      %v1380 = vunpack.c.l.b16 %v1348
      %v1381 = vpack.c.b16 %v1366, %v1365
      %v1382 = vpack.c.b16 %v1368, %v1367
      %v1383 = vpack.c.b16 %v1370, %v1369
      %v1384 = vpack.c.b16 %v1372, %v1371
      %v1385 = vpack.c.b16 %v1374, %v1373
      %v1386 = vpack.c.b16 %v1376, %v1375
      %v1387 = vpack.c.b16 %v1378, %v1377
      %v1388 = vpack.c.b16 %v1380, %v1379
      %1397 = vmatprep.subr.bf16.mxu0 0
      %1398 = vmatpush1.bf16.msra.mxu0 %v1381
      %1399 = vmatprep.subr.bf16.mxu0 0
      %1400 = vmatpush1.bf16.msra.mxu0 %v1382
      %1401 = vmatprep.subr.bf16.mxu0 0
      %1402 = vmatpush1.bf16.msra.mxu0 %v1383
      %1403 = vmatprep.subr.bf16.mxu0 0
      %1404 = vmatpush1.bf16.msra.mxu0 %v1384
      %1405 = vmatprep.subr.bf16.mxu0 0
      %1406 = vmatpush1.bf16.msra.mxu0 %v1385
      %1407 = vmatprep.subr.bf16.mxu0 0
      %1408 = vmatpush1.bf16.msra.mxu0 %v1386
      %1409 = vmatprep.subr.bf16.mxu0 0
      %1410 = vmatpush1.bf16.msra.mxu0 %v1387
      %1411 = vmatprep.subr.bf16.mxu0 0
      %1412 = vmatpush1.bf16.msra.mxu0 %v1388
      %1413 = vmatprep.subr.bf16.mxu0 0
      %1414 = vmatpush1.bf16.msra.mxu0 0
      %1415 = vmatprep.subr.bf16.mxu0 0
      %1416 = vmatpush1.bf16.msra.mxu0 0
      %1417 = vmatprep.subr.bf16.mxu0 0
      %1418 = vmatpush1.bf16.msra.mxu0 0
      %1419 = vmatprep.subr.bf16.mxu0 0
      %1420 = vmatpush1.bf16.msra.mxu0 0
      %1421 = vmatprep.subr.bf16.mxu0 0
      %1422 = vmatpush1.bf16.msra.mxu0 0
      %1423 = vmatprep.subr.bf16.mxu0 0
      %1424 = vmatpush1.bf16.msra.mxu0 0
      %1425 = vmatprep.subr.bf16.mxu0 0
      %1426 = vmatpush1.bf16.msra.mxu0 0
      %1427 = vmatprep.subr.bf16.mxu0 0
      %1428 = vmatpush1.bf16.msra.mxu0 0
      %1429 = vmatprep.mubr.bf16.mxu0 0
      %1430 = vmatmul.mubr.bf16.gmra.mrb[0].mxu0 %v329
      %v1431 = vpop.f32.mrb[0].mxu0
      %v1432 = vadd.f32 0.0, %v1431
      %v1433 = vpop.f32.mrb[0].mxu0
      %v1434 = vpop.f32.mrb[0].mxu0
      %v1435 = vadd.f32 0.0, %v1434
      %v1436 = vpop.f32.mrb[0].mxu0
      %1437 = vmatprep.mubr.bf16.mxu0 0
      %1438 = vmatmul.mubr.bf16.gmra.mrb[0].mxu0 %v330
      %v1439 = vpop.f32.mrb[0].mxu0
      %v1440 = vadd.f32 0.0, %v1439
      %v1441 = vpop.f32.mrb[0].mxu0
      %v1442 = vpop.f32.mrb[0].mxu0
      %v1443 = vadd.f32 0.0, %v1442
      %v1444 = vpop.f32.mrb[0].mxu0
      %1445 = vmatprep.mubr.bf16.mxu0 0
      %1446 = vmatmul.mubr.bf16.gmra.mrb[0].mxu0 %v331
      %v1447 = vpop.f32.mrb[0].mxu0
      %v1448 = vadd.f32 0.0, %v1447
      %v1449 = vpop.f32.mrb[0].mxu0
      %v1450 = vpop.f32.mrb[0].mxu0
      %v1451 = vadd.f32 0.0, %v1450
      %v1452 = vpop.f32.mrb[0].mxu0
      %1453 = vmatprep.mubr.bf16.mxu0 0
      %1454 = vmatmul.mubr.bf16.gmra.mrb[0].mxu0 %v1331
      %v1455 = vpop.f32.mrb[0].mxu0
      %v1456 = vadd.f32 0.0, %v1455
      %v1457 = vpop.f32.mrb[0].mxu0
      %v1458 = vpop.f32.mrb[0].mxu0
      %v1459 = vadd.f32 0.0, %v1458
      %v1460 = vpop.f32.mrb[0].mxu0
      %1461 = vdwg.mxu0
      %v1462 = vadd.f32 %v1317, %v1432
      %v1463 = vadd.f32 %v1318, %v1435
      %v1464 = vadd.f32 %v1319, %v1440
      %v1465 = vadd.f32 %v1320, %v1443
      %v1466 = vadd.f32 %v1321, %v1448
      %v1467 = vadd.f32 %v1322, %v1451
      %v1468 = vadd.f32 %v1323, %v1456
      %v1469 = vadd.f32 %v1324, %v1459
      %v1470 = vrot.slane %v257, 2
      %v1471 = vrot.slane %v258, 2
      %v1472 = vsel %vm575, %v1470, %v1471
      %v1474 = vpack.c.bf16 %v1472, %v1042
      %s1475 = scalar_lea.vmem %s1, 512
      %v1476 = vld [vmem:[%s1475] sm:$0xf]
      %v1477 = vld [vmem:[%s1475 + $0x4] sm:$0xf]
      %v1478 = vld [vmem:[%s1475 + $0x8] sm:$0xf]
      %v1479 = vld [vmem:[%s1475 + $0xc] sm:$0xf]
      %v1480 = vld [vmem:[%s1475 + $0x10] sm:$0xf]
      %v1481 = vld [vmem:[%s1475 + $0x14] sm:$0xf]
      %v1482 = vld [vmem:[%s1475 + $0x18] sm:$0xf]
      %v1483 = vld [vmem:[%s1475 + $0x1c] sm:$0xf]
      %v1484 = vld [vmem:[%s1475 + $0x20] sm:$0xf]
      %v1485 = vld [vmem:[%s1475 + $0x24] sm:$0xf]
      %v1486 = vld [vmem:[%s1475 + $0x28] sm:$0xf]
      %v1487 = vld [vmem:[%s1475 + $0x2c] sm:$0xf]
      %v1488 = vld [vmem:[%s1475 + $0x30] sm:$0xf]
      %v1489 = vld [vmem:[%s1475 + $0x34] sm:$0xf]
      %v1490 = vld [vmem:[%s1475 + $0x38] sm:$0xf]
      %v1491 = vld [vmem:[%s1475 + $0x3c] sm:$0xf]
      %v1508 = vunpack.c.l.b16 %v1476
      %v1509 = vunpack.c.l.b16 %v1477
      %v1510 = vunpack.c.l.b16 %v1478
      %v1511 = vunpack.c.l.b16 %v1479
      %v1512 = vunpack.c.l.b16 %v1480
      %v1513 = vunpack.c.l.b16 %v1481
      %v1514 = vunpack.c.l.b16 %v1482
      %v1515 = vunpack.c.l.b16 %v1483
      %v1516 = vunpack.c.l.b16 %v1484
      %v1517 = vunpack.c.l.b16 %v1485
      %v1518 = vunpack.c.l.b16 %v1486
      %v1519 = vunpack.c.l.b16 %v1487
      %v1520 = vunpack.c.l.b16 %v1488
      %v1521 = vunpack.c.l.b16 %v1489
      %v1522 = vunpack.c.l.b16 %v1490
      %v1523 = vunpack.c.l.b16 %v1491
      %v1524 = vpack.c.b16 %v1509, %v1508
      %v1525 = vpack.c.b16 %v1511, %v1510
      %v1526 = vpack.c.b16 %v1513, %v1512
      %v1527 = vpack.c.b16 %v1515, %v1514
      %v1528 = vpack.c.b16 %v1517, %v1516
      %v1529 = vpack.c.b16 %v1519, %v1518
      %v1530 = vpack.c.b16 %v1521, %v1520
      %v1531 = vpack.c.b16 %v1523, %v1522
      %1540 = vmatprep.subr.bf16.mxu0 0
      %1541 = vmatpush1.bf16.msra.mxu0 %v1524
      %1542 = vmatprep.subr.bf16.mxu0 0
      %1543 = vmatpush1.bf16.msra.mxu0 %v1525
      %1544 = vmatprep.subr.bf16.mxu0 0
      %1545 = vmatpush1.bf16.msra.mxu0 %v1526
      %1546 = vmatprep.subr.bf16.mxu0 0
      %1547 = vmatpush1.bf16.msra.mxu0 %v1527
      %1548 = vmatprep.subr.bf16.mxu0 0
      %1549 = vmatpush1.bf16.msra.mxu0 %v1528
      %1550 = vmatprep.subr.bf16.mxu0 0
      %1551 = vmatpush1.bf16.msra.mxu0 %v1529
      %1552 = vmatprep.subr.bf16.mxu0 0
      %1553 = vmatpush1.bf16.msra.mxu0 %v1530
      %1554 = vmatprep.subr.bf16.mxu0 0
      %1555 = vmatpush1.bf16.msra.mxu0 %v1531
      %1556 = vmatprep.subr.bf16.mxu0 0
      %1557 = vmatpush1.bf16.msra.mxu0 0
      %1558 = vmatprep.subr.bf16.mxu0 0
      %1559 = vmatpush1.bf16.msra.mxu0 0
      %1560 = vmatprep.subr.bf16.mxu0 0
      %1561 = vmatpush1.bf16.msra.mxu0 0
      %1562 = vmatprep.subr.bf16.mxu0 0
      %1563 = vmatpush1.bf16.msra.mxu0 0
      %1564 = vmatprep.subr.bf16.mxu0 0
      %1565 = vmatpush1.bf16.msra.mxu0 0
      %1566 = vmatprep.subr.bf16.mxu0 0
      %1567 = vmatpush1.bf16.msra.mxu0 0
      %1568 = vmatprep.subr.bf16.mxu0 0
      %1569 = vmatpush1.bf16.msra.mxu0 0
      %1570 = vmatprep.subr.bf16.mxu0 0
      %1571 = vmatpush1.bf16.msra.mxu0 0
      %1572 = vmatprep.mubr.bf16.mxu0 0
      %1573 = vmatmul.mubr.bf16.gmra.mrb[0].mxu0 %v609
      %v1574 = vpop.f32.mrb[0].mxu0
      %v1575 = vadd.f32 0.0, %v1574
      %v1576 = vpop.f32.mrb[0].mxu0
      %v1577 = vpop.f32.mrb[0].mxu0
      %v1578 = vadd.f32 0.0, %v1577
      %v1579 = vpop.f32.mrb[0].mxu0
      %1580 = vmatprep.mubr.bf16.mxu0 0
      %1581 = vmatmul.mubr.bf16.gmra.mrb[0].mxu0 %v610
      %v1582 = vpop.f32.mrb[0].mxu0
      %v1583 = vadd.f32 0.0, %v1582
      %v1584 = vpop.f32.mrb[0].mxu0
      %v1585 = vpop.f32.mrb[0].mxu0
      %v1586 = vadd.f32 0.0, %v1585
      %v1587 = vpop.f32.mrb[0].mxu0
      %1588 = vmatprep.mubr.bf16.mxu0 0
      %1589 = vmatmul.mubr.bf16.gmra.mrb[0].mxu0 %v611
      %v1590 = vpop.f32.mrb[0].mxu0
      %v1591 = vadd.f32 0.0, %v1590
      %v1592 = vpop.f32.mrb[0].mxu0
      %v1593 = vpop.f32.mrb[0].mxu0
      %v1594 = vadd.f32 0.0, %v1593
      %v1595 = vpop.f32.mrb[0].mxu0
      %1596 = vmatprep.mubr.bf16.mxu0 0
      %1597 = vmatmul.mubr.bf16.gmra.mrb[0].mxu0 %v1474
      %v1598 = vpop.f32.mrb[0].mxu0
      %v1599 = vadd.f32 0.0, %v1598
      %v1600 = vpop.f32.mrb[0].mxu0
      %v1601 = vpop.f32.mrb[0].mxu0
      %v1602 = vadd.f32 0.0, %v1601
      %v1603 = vpop.f32.mrb[0].mxu0
      %1604 = vdwg.mxu0
      %v1605 = vadd.f32 %v1462, %v1575
      %v1606 = vadd.f32 %v1463, %v1578
      %v1607 = vadd.f32 %v1464, %v1583
      %v1608 = vadd.f32 %v1465, %v1586
      %v1609 = vadd.f32 %v1466, %v1591
      %v1610 = vadd.f32 %v1467, %v1594
      %v1611 = vadd.f32 %v1468, %v1599
      %v1612 = vadd.f32 %v1469, %v1602
      %v1613 = vld [vmem:[%s2] sm:$0x1]
      %v1615 = vlaneseq
      %v1616 = vshrl.u32 %v1615, 7
      %v1617 = vsub.s32 0, %v1616
      %v1618 = vrot.slane %v1613, %v1617
      %v1620 = vadd.f32 %v1605, %v1618
      %v1621 = vadd.f32 %v1606, %v1618
      %v1622 = vadd.f32 %v1607, %v1618
      %v1623 = vadd.f32 %v1608, %v1618
      %v1624 = vadd.f32 %v1609, %v1618
      %v1625 = vadd.f32 %v1610, %v1618
      %v1626 = vadd.f32 %v1611, %v1618
      %v1627 = vadd.f32 %v1612, %v1618
      %v1628 = vld [vmem:[%s212] sm:$0xff]
      %v1629 = vld [vmem:[%s212 + $0x8] sm:$0xff]
      %v1630 = vld [vmem:[%s212 + $0x10] sm:$0xff]
      %v1631 = vld [vmem:[%s212 + $0x18] sm:$0xff]
      %v1632 = vld [vmem:[%s212 + $0x20] sm:$0xff]
      %v1633 = vld [vmem:[%s212 + $0x28] sm:$0xff]
      %v1634 = vld [vmem:[%s212 + $0x30] sm:$0xff]
      %v1635 = vld [vmem:[%s212 + $0x38] sm:$0xff]
      %v1636 = vadd.f32 %v1620, %v1628
      %v1637 = vadd.f32 %v1621, %v1629
      %v1638 = vadd.f32 %v1622, %v1630
      %v1639 = vadd.f32 %v1623, %v1631
      %v1640 = vadd.f32 %v1624, %v1632
      %v1641 = vadd.f32 %v1625, %v1633
      %v1642 = vadd.f32 %v1626, %v1634
      %v1643 = vadd.f32 %v1627, %v1635
      %v1644 = vmax.f32 %v1636, 0.0
      %v1645 = vmax.f32 %v1637, 0.0
      %v1646 = vmax.f32 %v1638, 0.0
      %v1647 = vmax.f32 %v1639, 0.0
      %v1648 = vmax.f32 %v1640, 0.0
      %v1649 = vmax.f32 %v1641, 0.0
      %v1650 = vmax.f32 %v1642, 0.0
      %v1651 = vmax.f32 %v1643, 0.0
      %1652 = vst [vmem:[%s217] sm:$0xff] %v1644
      %1653 = vst [vmem:[%s217 + $0x8] sm:$0xff] %v1645
      %1654 = vst [vmem:[%s217 + $0x10] sm:$0xff] %v1646
      %1655 = vst [vmem:[%s217 + $0x18] sm:$0xff] %v1647
      %1656 = vst [vmem:[%s217 + $0x20] sm:$0xff] %v1648
      %1657 = vst [vmem:[%s217 + $0x28] sm:$0xff] %v1649
      %1658 = vst [vmem:[%s217 + $0x30] sm:$0xff] %v1650
      %1659 = vst [vmem:[%s217 + $0x38] sm:$0xff] %v1651
      %p1660 = scmp.lt.s32.totalorder %s15, 1
      %s1661 = scalar_select %p1660, %s15, 1
      %s1662 = smul.addr %s1661, 8
      %s1663 = smul.addr %s1662, 8
      %s1664 = scalar_lea.vmem %s4, %s1663
      // Predicated region
      $region37: #{res_down_block.3} parent=35 // pred_check
        %p1665 = pneg %p127
      $region38: #{res_down_block.3} parent=35 // pred_check_branch
        %1667 = sbr.rel (%p1665) target = $region40
      $region39: #{res_down_block.3} parent=35 // pred_region
        _
      $region40: #{res_down_block.3} parent=35 // pred_fallthru
        _
    $region36: #{res_down_block.3} parent=5 // pred_fallthru
      _
    %p1668 = scmp.le.s32.totalorder 2, %s10
    // Predicated region
    $region41: #{res_down_block.3} parent=5 // pred_check
      %p1669 = pneg %p1668
    $region42: #{res_down_block.3} parent=5 // pred_check_branch
      %1671 = sbr.rel (%p1669) target = $region44
    $region43: #{res_down_block.3} parent=5 // pred_region
      %s1672 = ssub.s32 %s10, 2
      // Predicated region
      $region45: #{res_down_block.3} parent=43 // pred_check
        %p1673 = pneg %p133
      $region46: #{res_down_block.3} parent=43 // pred_check_branch
        %1675 = sbr.rel (%p1673) target = $region48
      $region47: #{res_down_block.3} parent=43 // pred_region
        %p1676 = scmp.lt.s32.totalorder %s16, 1
        %s1677 = scalar_select %p1676, %s16, 1
        %s1678 = smul.addr %s1677, 8
        %s1679 = smul.addr %s1678, 8
        %s1680 = scalar_lea.vmem %s4, %s1679
      $region48: #{res_down_block.3} parent=43 // pred_fallthru
        _
    $region44: #{res_down_block.3} parent=5 // pred_fallthru
      _
  $region6: #{res_down_block.3} parent=0 // loop_footer
    %s14 = sadd.s32 1, %s10
  $region7: #{res_down_block.3} parent=0 // loop_footer_branch
    %9 = sbr.rel target = $region3
  $region8: #{res_down_block.3} parent=0 // loop_exit
    _

</llo_original>
